<compile_context>
chip_gen: v6e
topology: v6e:2x2x1
jax: 0.10.0
libtpu: 0.0.40
codegen_flags: <defaults>
</compile_context>

<pallas_src>
import functools

import jax
import jax.numpy as jnp
from jax.experimental import pallas as pl
from jax.experimental.pallas import tpu as pltpu

_F = 10          # Linear(10, 10)
_LANES = 128     # vreg lane width
_SUBLANES = 8    # f32 vreg sublane depth


def _round_up(n: int, m: int) -> int:
    return ((n + m - 1) // m) * m


def mlp_kernel(x_ref, wa_ref, ba_ref, wb_ref, bb_ref, o_ref, *, num_chunks, chunk_rows):
    """One batch tile of Linear -> ReLU -> Linear -> sigmoid.

    x_ref / o_ref : (F, c_blk, 128) VMEM  -- per-feature dense batch planes.
    wa_ref, wb_ref: (F, F)  SMEM, PyTorch (out, in) layout, read as scalars.
    ba_ref, bb_ref: (F,)    SMEM.
    """
    f = _F
    # num_chunks is a static Python int, so this loop is a full unroll with purely
    # static, aligned slice offsets (equivalent to lax.fori_loop(..., unroll=True)).
    for c in range(num_chunks):
        r0 = c * chunk_rows

        # F dense (chunk_rows, 128) planes -- one full f32 vreg each at chunk_rows=8.
        xs = [x_ref[k, r0:r0 + chunk_rows, :] for k in range(f)]

        # Layer a: h_i = relu(sum_k wa[i,k] * x_k + ba[i])  -- scalar-splat FMAs.
        hs = []
        for i in range(f):
            acc = wa_ref[i, 0] * xs[0]
            for k in range(1, f):
                acc = acc + wa_ref[i, k] * xs[k]
            hs.append(jnp.maximum(acc + ba_ref[i], 0.0))

        # Layer b + sigmoid.  sigmoid(z) = 0.5*(tanh(z/2)+1): single EUP op per
        # plane (idle slot), removes the negate/add/divide from the VPU path.
        for i in range(f):
            acc = wb_ref[i, 0] * hs[0]
            for k in range(1, f):
                acc = acc + wb_ref[i, k] * hs[k]
            z = acc + bb_ref[i]
            o_ref[i, r0:r0 + chunk_rows, :] = (
                0.5 * (jnp.tanh(0.5 * z) + 1.0)).astype(o_ref.dtype)


def my_module_forward(x, wa, ba, wb, bb, *, tb=4096):
    """x: (B, 10) f32; wa, wb: PyTorch (out, in) weights; ba, bb: (out,). -> (B, 10)."""
    B, f = x.shape
    assert f == _F

    # Lane-dense batch tiling: tb lanes per grid step (rounded to a multiple of 128),
    # processed inside the kernel in 1024-lane (8x128) chunks.
    tb = _round_up(max(int(tb), _LANES), _LANES)
    Bp = _round_up(B, _LANES)
    c_total = Bp // _LANES                       # 128-lane rows in the padded batch
    c_blk = min(tb // _LANES, c_total)           # rows per grid step
    if c_blk >= _SUBLANES:
        c_blk = (c_blk // _SUBLANES) * _SUBLANES  # keep the (8,128) divisibility rule
        chunk_rows = _SUBLANES
    else:
        chunk_rows = c_blk                        # tiny batch: one sub-vreg chunk
    num_chunks = c_blk // chunk_rows
    grid = (pl.cdiv(c_total, c_blk),)             # partial last block handled by Pallas

    # One cheap layout pass outside the kernel: put the batch on the lane axis.
    # The reshape to (F, c_total, 128) is a metadata-only view of the same buffer.
    # TODO(synk): in a fused graph, keep activations in (F, B) layout end-to-end so
    # this transpose (and the inverse at the end) disappears entirely.
    x_t = x.T
    if Bp != B:
        x_t = jnp.pad(x_t, ((0, 0), (0, Bp - B)))
    x3 = x_t.reshape(f, c_total, _LANES)

    cost = pl.CostEstimate(
        flops=2 * 2 * Bp * f * f + 4 * Bp * f,     # two 10x10 "matmuls" + bias/ReLU
        transcendentals=Bp * f,                    # one tanh per output element
        bytes_accessed=(2 * Bp * f + 2 * f * f + 2 * f) * 4,
    )

    out3 = pl.pallas_call(
        functools.partial(mlp_kernel, num_chunks=num_chunks, chunk_rows=chunk_rows),
        out_shape=jax.ShapeDtypeStruct((f, c_total, _LANES), x.dtype),
        grid=grid,
        in_specs=[
            pl.BlockSpec((f, c_blk, _LANES), lambda i: (0, i, 0)),      # x: streamed
            pl.BlockSpec(memory_space=pltpu.MemorySpace.SMEM),          # wa (scalars)
            pl.BlockSpec(memory_space=pltpu.MemorySpace.SMEM),          # ba
            pl.BlockSpec(memory_space=pltpu.MemorySpace.SMEM),          # wb
            pl.BlockSpec(memory_space=pltpu.MemorySpace.SMEM),          # bb
        ],
        out_specs=pl.BlockSpec((f, c_blk, _LANES), lambda i: (0, i, 0)),
        compiler_params=pltpu.CompilerParams(
            # TODO(synk): on v7x, pltpu.CORE_PARALLEL (with >=2 grid steps) would
            # split batch tiles across both TensorCores; "parallel" is the portable
            # choice across v5e/v6e/v7x.
            dimension_semantics=("parallel",)),
        cost_estimate=cost,
    )(x3, wa, ba, wb, bb)

    # Un-pad and return to the module's (B, F) layout.
    return out3.reshape(f, Bp)[:, :B].T


if __name__ == "__main__":
    key = jax.random.PRNGKey(0)
    k_x, k_wa, k_ba, k_wb, k_bb = jax.random.split(key, 5)

    B, F = 8, 10  # Linear(10, 10): feature dim 10, small demo batch

    # Deterministic parameter init (mimics nn.Linear uniform(-1/sqrt(in), 1/sqrt(in))).
    bound = 1.0 / jnp.sqrt(jnp.float32(F))
    x = jax.random.normal(k_x, (B, F), dtype=jnp.float32)
    wa = jax.random.uniform(k_wa, (F, F), minval=-bound, maxval=bound, dtype=jnp.float32)
    ba = jax.random.uniform(k_ba, (F,), minval=-bound, maxval=bound, dtype=jnp.float32)
    wb = jax.random.uniform(k_wb, (F, F), minval=-bound, maxval=bound, dtype=jnp.float32)
    bb = jax.random.uniform(k_bb, (F,), minval=-bound, maxval=bound, dtype=jnp.float32)

    def ref_fn(xx):
        return jax.nn.sigmoid(jnp.maximum(xx @ wa.T + ba, 0.0) @ wb.T + bb)

    out = my_module_forward(x, wa, ba, wb, bb)
    jax.block_until_ready(out)
    assert out.shape == (B, F)
    assert jnp.allclose(out, ref_fn(x), atol=1e-5, rtol=1e-5), "mismatch vs reference (B=8)"

    # Exercise multi-chunk, multi-grid-step and partial-last-block paths.
    for b2 in (1000, 4500):
        x2 = jax.random.normal(jax.random.PRNGKey(b2), (b2, F), dtype=jnp.float32)
        out2 = my_module_forward(x2, wa, ba, wb, bb)
        jax.block_until_ready(out2)
        assert out2.shape == (b2, F)
        assert jnp.allclose(out2, ref_fn(x2), atol=1e-5, rtol=1e-5), f"mismatch (B={b2})"

    print("KERNEL_OK")
</pallas_src>

<mosaic_0001>
module attributes {stable_mosaic.version = 11 : i64} {
  func.func @mlp_kernel(%arg0: i32, %arg1: memref<10x1x128xf32, #tpu.memory_space<vmem>>, %arg2: memref<10x10xf32, #tpu.memory_space<smem>>, %arg3: memref<10xf32, #tpu.memory_space<smem>>, %arg4: memref<10x10xf32, #tpu.memory_space<smem>>, %arg5: memref<10xf32, #tpu.memory_space<smem>>, %arg6: memref<10x1x128xf32, #tpu.memory_space<vmem>>) attributes {dimension_semantics = [#tpu.dimension_semantics<parallel>], iteration_bounds = array<i64: 1>, scalar_prefetch = 0 : i64, scratch_operands = 0 : i64, tpu.core_type = #tpu.core_type<tc>, window_params = [{transform_indices = @transform_0, window_bounds = array<i64: 10, 1, 128>}, {transform_indices = @transform_1, window_bounds = array<i64: 10, 10>}, {transform_indices = @transform_2, window_bounds = array<i64: 10>}, {transform_indices = @transform_3, window_bounds = array<i64: 10, 10>}, {transform_indices = @transform_4, window_bounds = array<i64: 10>}, {transform_indices = @transform_5, window_bounds = array<i64: 10, 1, 128>}]} {
    %c0 = arith.constant 0 : index
    %c0_0 = arith.constant 0 : index
    %c0_1 = arith.constant 0 : index
    %0 = vector.load %arg1[%c0, %c0_0, %c0_1] : memref<10x1x128xf32, #tpu.memory_space<vmem>>, vector<1x1x128xf32>
    %1 = vector.shape_cast %0 : vector<1x1x128xf32> to vector<1x128xf32>
    %c1 = arith.constant 1 : index
    %c0_2 = arith.constant 0 : index
    %c0_3 = arith.constant 0 : index
    %2 = vector.load %arg1[%c1, %c0_2, %c0_3] : memref<10x1x128xf32, #tpu.memory_space<vmem>>, vector<1x1x128xf32>
    %3 = vector.shape_cast %2 : vector<1x1x128xf32> to vector<1x128xf32>
    %c2 = arith.constant 2 : index
    %c0_4 = arith.constant 0 : index
    %c0_5 = arith.constant 0 : index
    %4 = vector.load %arg1[%c2, %c0_4, %c0_5] : memref<10x1x128xf32, #tpu.memory_space<vmem>>, vector<1x1x128xf32>
    %5 = vector.shape_cast %4 : vector<1x1x128xf32> to vector<1x128xf32>
    %c3 = arith.constant 3 : index
    %c0_6 = arith.constant 0 : index
    %c0_7 = arith.constant 0 : index
    %6 = vector.load %arg1[%c3, %c0_6, %c0_7] : memref<10x1x128xf32, #tpu.memory_space<vmem>>, vector<1x1x128xf32>
    %7 = vector.shape_cast %6 : vector<1x1x128xf32> to vector<1x128xf32>
    %c4 = arith.constant 4 : index
    %c0_8 = arith.constant 0 : index
    %c0_9 = arith.constant 0 : index
    %8 = vector.load %arg1[%c4, %c0_8, %c0_9] : memref<10x1x128xf32, #tpu.memory_space<vmem>>, vector<1x1x128xf32>
    %9 = vector.shape_cast %8 : vector<1x1x128xf32> to vector<1x128xf32>
    %c5 = arith.constant 5 : index
    %c0_10 = arith.constant 0 : index
    %c0_11 = arith.constant 0 : index
    %10 = vector.load %arg1[%c5, %c0_10, %c0_11] : memref<10x1x128xf32, #tpu.memory_space<vmem>>, vector<1x1x128xf32>
    %11 = vector.shape_cast %10 : vector<1x1x128xf32> to vector<1x128xf32>
    %c6 = arith.constant 6 : index
    %c0_12 = arith.constant 0 : index
    %c0_13 = arith.constant 0 : index
    %12 = vector.load %arg1[%c6, %c0_12, %c0_13] : memref<10x1x128xf32, #tpu.memory_space<vmem>>, vector<1x1x128xf32>
    %13 = vector.shape_cast %12 : vector<1x1x128xf32> to vector<1x128xf32>
    %c7 = arith.constant 7 : index
    %c0_14 = arith.constant 0 : index
    %c0_15 = arith.constant 0 : index
    %14 = vector.load %arg1[%c7, %c0_14, %c0_15] : memref<10x1x128xf32, #tpu.memory_space<vmem>>, vector<1x1x128xf32>
    %15 = vector.shape_cast %14 : vector<1x1x128xf32> to vector<1x128xf32>
    %c8 = arith.constant 8 : index
    %c0_16 = arith.constant 0 : index
    %c0_17 = arith.constant 0 : index
    %16 = vector.load %arg1[%c8, %c0_16, %c0_17] : memref<10x1x128xf32, #tpu.memory_space<vmem>>, vector<1x1x128xf32>
    %17 = vector.shape_cast %16 : vector<1x1x128xf32> to vector<1x128xf32>
    %c9 = arith.constant 9 : index
    %c0_18 = arith.constant 0 : index
    %c0_19 = arith.constant 0 : index
    %18 = vector.load %arg1[%c9, %c0_18, %c0_19] : memref<10x1x128xf32, #tpu.memory_space<vmem>>, vector<1x1x128xf32>
    %19 = vector.shape_cast %18 : vector<1x1x128xf32> to vector<1x128xf32>
    %c0_20 = arith.constant 0 : index
    %c0_21 = arith.constant 0 : index
    %20 = memref.load %arg2[%c0_20, %c0_21] : memref<10x10xf32, #tpu.memory_space<smem>>
    %21 = vector.broadcast %20 : f32 to vector<1x128xf32>
    %22 = arith.mulf %21, %1 : vector<1x128xf32>
    %c0_22 = arith.constant 0 : index
    %c1_23 = arith.constant 1 : index
    %23 = memref.load %arg2[%c0_22, %c1_23] : memref<10x10xf32, #tpu.memory_space<smem>>
    %24 = vector.broadcast %23 : f32 to vector<1x128xf32>
    %25 = arith.mulf %24, %3 : vector<1x128xf32>
    %26 = arith.addf %22, %25 : vector<1x128xf32>
    %c0_24 = arith.constant 0 : index
    %c2_25 = arith.constant 2 : index
    %27 = memref.load %arg2[%c0_24, %c2_25] : memref<10x10xf32, #tpu.memory_space<smem>>
    %28 = vector.broadcast %27 : f32 to vector<1x128xf32>
    %29 = arith.mulf %28, %5 : vector<1x128xf32>
    %30 = arith.addf %26, %29 : vector<1x128xf32>
    %c0_26 = arith.constant 0 : index
    %c3_27 = arith.constant 3 : index
    %31 = memref.load %arg2[%c0_26, %c3_27] : memref<10x10xf32, #tpu.memory_space<smem>>
    %32 = vector.broadcast %31 : f32 to vector<1x128xf32>
    %33 = arith.mulf %32, %7 : vector<1x128xf32>
    %34 = arith.addf %30, %33 : vector<1x128xf32>
    %c0_28 = arith.constant 0 : index
    %c4_29 = arith.constant 4 : index
    %35 = memref.load %arg2[%c0_28, %c4_29] : memref<10x10xf32, #tpu.memory_space<smem>>
    %36 = vector.broadcast %35 : f32 to vector<1x128xf32>
    %37 = arith.mulf %36, %9 : vector<1x128xf32>
    %38 = arith.addf %34, %37 : vector<1x128xf32>
    %c0_30 = arith.constant 0 : index
    %c5_31 = arith.constant 5 : index
    %39 = memref.load %arg2[%c0_30, %c5_31] : memref<10x10xf32, #tpu.memory_space<smem>>
    %40 = vector.broadcast %39 : f32 to vector<1x128xf32>
    %41 = arith.mulf %40, %11 : vector<1x128xf32>
    %42 = arith.addf %38, %41 : vector<1x128xf32>
    %c0_32 = arith.constant 0 : index
    %c6_33 = arith.constant 6 : index
    %43 = memref.load %arg2[%c0_32, %c6_33] : memref<10x10xf32, #tpu.memory_space<smem>>
    %44 = vector.broadcast %43 : f32 to vector<1x128xf32>
    %45 = arith.mulf %44, %13 : vector<1x128xf32>
    %46 = arith.addf %42, %45 : vector<1x128xf32>
    %c0_34 = arith.constant 0 : index
    %c7_35 = arith.constant 7 : index
    %47 = memref.load %arg2[%c0_34, %c7_35] : memref<10x10xf32, #tpu.memory_space<smem>>
    %48 = vector.broadcast %47 : f32 to vector<1x128xf32>
    %49 = arith.mulf %48, %15 : vector<1x128xf32>
    %50 = arith.addf %46, %49 : vector<1x128xf32>
    %c0_36 = arith.constant 0 : index
    %c8_37 = arith.constant 8 : index
    %51 = memref.load %arg2[%c0_36, %c8_37] : memref<10x10xf32, #tpu.memory_space<smem>>
    %52 = vector.broadcast %51 : f32 to vector<1x128xf32>
    %53 = arith.mulf %52, %17 : vector<1x128xf32>
    %54 = arith.addf %50, %53 : vector<1x128xf32>
    %c0_38 = arith.constant 0 : index
    %c9_39 = arith.constant 9 : index
    %55 = memref.load %arg2[%c0_38, %c9_39] : memref<10x10xf32, #tpu.memory_space<smem>>
    %56 = vector.broadcast %55 : f32 to vector<1x128xf32>
    %57 = arith.mulf %56, %19 : vector<1x128xf32>
    %58 = arith.addf %54, %57 : vector<1x128xf32>
    %c0_40 = arith.constant 0 : index
    %59 = memref.load %arg3[%c0_40] : memref<10xf32, #tpu.memory_space<smem>>
    %60 = vector.broadcast %59 : f32 to vector<1x128xf32>
    %61 = arith.addf %58, %60 : vector<1x128xf32>
    %cst = arith.constant 0.000000e+00 : f32
    %62 = vector.broadcast %cst : f32 to vector<1x128xf32>
    %63 = arith.maximumf %61, %62 : vector<1x128xf32>
    %c1_41 = arith.constant 1 : index
    %c0_42 = arith.constant 0 : index
    %64 = memref.load %arg2[%c1_41, %c0_42] : memref<10x10xf32, #tpu.memory_space<smem>>
    %65 = vector.broadcast %64 : f32 to vector<1x128xf32>
    %66 = arith.mulf %65, %1 : vector<1x128xf32>
    %c1_43 = arith.constant 1 : index
    %c1_44 = arith.constant 1 : index
    %67 = memref.load %arg2[%c1_43, %c1_44] : memref<10x10xf32, #tpu.memory_space<smem>>
    %68 = vector.broadcast %67 : f32 to vector<1x128xf32>
    %69 = arith.mulf %68, %3 : vector<1x128xf32>
    %70 = arith.addf %66, %69 : vector<1x128xf32>
    %c1_45 = arith.constant 1 : index
    %c2_46 = arith.constant 2 : index
    %71 = memref.load %arg2[%c1_45, %c2_46] : memref<10x10xf32, #tpu.memory_space<smem>>
    %72 = vector.broadcast %71 : f32 to vector<1x128xf32>
    %73 = arith.mulf %72, %5 : vector<1x128xf32>
    %74 = arith.addf %70, %73 : vector<1x128xf32>
    %c1_47 = arith.constant 1 : index
    %c3_48 = arith.constant 3 : index
    %75 = memref.load %arg2[%c1_47, %c3_48] : memref<10x10xf32, #tpu.memory_space<smem>>
    %76 = vector.broadcast %75 : f32 to vector<1x128xf32>
    %77 = arith.mulf %76, %7 : vector<1x128xf32>
    %78 = arith.addf %74, %77 : vector<1x128xf32>
    %c1_49 = arith.constant 1 : index
    %c4_50 = arith.constant 4 : index
    %79 = memref.load %arg2[%c1_49, %c4_50] : memref<10x10xf32, #tpu.memory_space<smem>>
    %80 = vector.broadcast %79 : f32 to vector<1x128xf32>
    %81 = arith.mulf %80, %9 : vector<1x128xf32>
    %82 = arith.addf %78, %81 : vector<1x128xf32>
    %c1_51 = arith.constant 1 : index
    %c5_52 = arith.constant 5 : index
    %83 = memref.load %arg2[%c1_51, %c5_52] : memref<10x10xf32, #tpu.memory_space<smem>>
    %84 = vector.broadcast %83 : f32 to vector<1x128xf32>
    %85 = arith.mulf %84, %11 : vector<1x128xf32>
    %86 = arith.addf %82, %85 : vector<1x128xf32>
    %c1_53 = arith.constant 1 : index
    %c6_54 = arith.constant 6 : index
    %87 = memref.load %arg2[%c1_53, %c6_54] : memref<10x10xf32, #tpu.memory_space<smem>>
    %88 = vector.broadcast %87 : f32 to vector<1x128xf32>
    %89 = arith.mulf %88, %13 : vector<1x128xf32>
    %90 = arith.addf %86, %89 : vector<1x128xf32>
    %c1_55 = arith.constant 1 : index
    %c7_56 = arith.constant 7 : index
    %91 = memref.load %arg2[%c1_55, %c7_56] : memref<10x10xf32, #tpu.memory_space<smem>>
    %92 = vector.broadcast %91 : f32 to vector<1x128xf32>
    %93 = arith.mulf %92, %15 : vector<1x128xf32>
    %94 = arith.addf %90, %93 : vector<1x128xf32>
    %c1_57 = arith.constant 1 : index
    %c8_58 = arith.constant 8 : index
    %95 = memref.load %arg2[%c1_57, %c8_58] : memref<10x10xf32, #tpu.memory_space<smem>>
    %96 = vector.broadcast %95 : f32 to vector<1x128xf32>
    %97 = arith.mulf %96, %17 : vector<1x128xf32>
    %98 = arith.addf %94, %97 : vector<1x128xf32>
    %c1_59 = arith.constant 1 : index
    %c9_60 = arith.constant 9 : index
    %99 = memref.load %arg2[%c1_59, %c9_60] : memref<10x10xf32, #tpu.memory_space<smem>>
    %100 = vector.broadcast %99 : f32 to vector<1x128xf32>
    %101 = arith.mulf %100, %19 : vector<1x128xf32>
    %102 = arith.addf %98, %101 : vector<1x128xf32>
    %c1_61 = arith.constant 1 : index
    %103 = memref.load %arg3[%c1_61] : memref<10xf32, #tpu.memory_space<smem>>
    %104 = vector.broadcast %103 : f32 to vector<1x128xf32>
    %105 = arith.addf %102, %104 : vector<1x128xf32>
    %cst_62 = arith.constant 0.000000e+00 : f32
    %106 = vector.broadcast %cst_62 : f32 to vector<1x128xf32>
    %107 = arith.maximumf %105, %106 : vector<1x128xf32>
    %c2_63 = arith.constant 2 : index
    %c0_64 = arith.constant 0 : index
    %108 = memref.load %arg2[%c2_63, %c0_64] : memref<10x10xf32, #tpu.memory_space<smem>>
    %109 = vector.broadcast %108 : f32 to vector<1x128xf32>
    %110 = arith.mulf %109, %1 : vector<1x128xf32>
    %c2_65 = arith.constant 2 : index
    %c1_66 = arith.constant 1 : index
    %111 = memref.load %arg2[%c2_65, %c1_66] : memref<10x10xf32, #tpu.memory_space<smem>>
    %112 = vector.broadcast %111 : f32 to vector<1x128xf32>
    %113 = arith.mulf %112, %3 : vector<1x128xf32>
    %114 = arith.addf %110, %113 : vector<1x128xf32>
    %c2_67 = arith.constant 2 : index
    %c2_68 = arith.constant 2 : index
    %115 = memref.load %arg2[%c2_67, %c2_68] : memref<10x10xf32, #tpu.memory_space<smem>>
    %116 = vector.broadcast %115 : f32 to vector<1x128xf32>
    %117 = arith.mulf %116, %5 : vector<1x128xf32>
    %118 = arith.addf %114, %117 : vector<1x128xf32>
    %c2_69 = arith.constant 2 : index
    %c3_70 = arith.constant 3 : index
    %119 = memref.load %arg2[%c2_69, %c3_70] : memref<10x10xf32, #tpu.memory_space<smem>>
    %120 = vector.broadcast %119 : f32 to vector<1x128xf32>
    %121 = arith.mulf %120, %7 : vector<1x128xf32>
    %122 = arith.addf %118, %121 : vector<1x128xf32>
    %c2_71 = arith.constant 2 : index
    %c4_72 = arith.constant 4 : index
    %123 = memref.load %arg2[%c2_71, %c4_72] : memref<10x10xf32, #tpu.memory_space<smem>>
    %124 = vector.broadcast %123 : f32 to vector<1x128xf32>
    %125 = arith.mulf %124, %9 : vector<1x128xf32>
    %126 = arith.addf %122, %125 : vector<1x128xf32>
    %c2_73 = arith.constant 2 : index
    %c5_74 = arith.constant 5 : index
    %127 = memref.load %arg2[%c2_73, %c5_74] : memref<10x10xf32, #tpu.memory_space<smem>>
    %128 = vector.broadcast %127 : f32 to vector<1x128xf32>
    %129 = arith.mulf %128, %11 : vector<1x128xf32>
    %130 = arith.addf %126, %129 : vector<1x128xf32>
    %c2_75 = arith.constant 2 : index
    %c6_76 = arith.constant 6 : index
    %131 = memref.load %arg2[%c2_75, %c6_76] : memref<10x10xf32, #tpu.memory_space<smem>>
    %132 = vector.broadcast %131 : f32 to vector<1x128xf32>
    %133 = arith.mulf %132, %13 : vector<1x128xf32>
    %134 = arith.addf %130, %133 : vector<1x128xf32>
    %c2_77 = arith.constant 2 : index
    %c7_78 = arith.constant 7 : index
    %135 = memref.load %arg2[%c2_77, %c7_78] : memref<10x10xf32, #tpu.memory_space<smem>>
    %136 = vector.broadcast %135 : f32 to vector<1x128xf32>
    %137 = arith.mulf %136, %15 : vector<1x128xf32>
    %138 = arith.addf %134, %137 : vector<1x128xf32>
    %c2_79 = arith.constant 2 : index
    %c8_80 = arith.constant 8 : index
    %139 = memref.load %arg2[%c2_79, %c8_80] : memref<10x10xf32, #tpu.memory_space<smem>>
    %140 = vector.broadcast %139 : f32 to vector<1x128xf32>
    %141 = arith.mulf %140, %17 : vector<1x128xf32>
    %142 = arith.addf %138, %141 : vector<1x128xf32>
    %c2_81 = arith.constant 2 : index
    %c9_82 = arith.constant 9 : index
    %143 = memref.load %arg2[%c2_81, %c9_82] : memref<10x10xf32, #tpu.memory_space<smem>>
    %144 = vector.broadcast %143 : f32 to vector<1x128xf32>
    %145 = arith.mulf %144, %19 : vector<1x128xf32>
    %146 = arith.addf %142, %145 : vector<1x128xf32>
    %c2_83 = arith.constant 2 : index
    %147 = memref.load %arg3[%c2_83] : memref<10xf32, #tpu.memory_space<smem>>
    %148 = vector.broadcast %147 : f32 to vector<1x128xf32>
    %149 = arith.addf %146, %148 : vector<1x128xf32>
    %cst_84 = arith.constant 0.000000e+00 : f32
    %150 = vector.broadcast %cst_84 : f32 to vector<1x128xf32>
    %151 = arith.maximumf %149, %150 : vector<1x128xf32>
    %c3_85 = arith.constant 3 : index
    %c0_86 = arith.constant 0 : index
    %152 = memref.load %arg2[%c3_85, %c0_86] : memref<10x10xf32, #tpu.memory_space<smem>>
    %153 = vector.broadcast %152 : f32 to vector<1x128xf32>
    %154 = arith.mulf %153, %1 : vector<1x128xf32>
    %c3_87 = arith.constant 3 : index
    %c1_88 = arith.constant 1 : index
    %155 = memref.load %arg2[%c3_87, %c1_88] : memref<10x10xf32, #tpu.memory_space<smem>>
    %156 = vector.broadcast %155 : f32 to vector<1x128xf32>
    %157 = arith.mulf %156, %3 : vector<1x128xf32>
    %158 = arith.addf %154, %157 : vector<1x128xf32>
    %c3_89 = arith.constant 3 : index
    %c2_90 = arith.constant 2 : index
    %159 = memref.load %arg2[%c3_89, %c2_90] : memref<10x10xf32, #tpu.memory_space<smem>>
    %160 = vector.broadcast %159 : f32 to vector<1x128xf32>
    %161 = arith.mulf %160, %5 : vector<1x128xf32>
    %162 = arith.addf %158, %161 : vector<1x128xf32>
    %c3_91 = arith.constant 3 : index
    %c3_92 = arith.constant 3 : index
    %163 = memref.load %arg2[%c3_91, %c3_92] : memref<10x10xf32, #tpu.memory_space<smem>>
    %164 = vector.broadcast %163 : f32 to vector<1x128xf32>
    %165 = arith.mulf %164, %7 : vector<1x128xf32>
    %166 = arith.addf %162, %165 : vector<1x128xf32>
    %c3_93 = arith.constant 3 : index
    %c4_94 = arith.constant 4 : index
    %167 = memref.load %arg2[%c3_93, %c4_94] : memref<10x10xf32, #tpu.memory_space<smem>>
    %168 = vector.broadcast %167 : f32 to vector<1x128xf32>
    %169 = arith.mulf %168, %9 : vector<1x128xf32>
    %170 = arith.addf %166, %169 : vector<1x128xf32>
    %c3_95 = arith.constant 3 : index
    %c5_96 = arith.constant 5 : index
    %171 = memref.load %arg2[%c3_95, %c5_96] : memref<10x10xf32, #tpu.memory_space<smem>>
    %172 = vector.broadcast %171 : f32 to vector<1x128xf32>
    %173 = arith.mulf %172, %11 : vector<1x128xf32>
    %174 = arith.addf %170, %173 : vector<1x128xf32>
    %c3_97 = arith.constant 3 : index
    %c6_98 = arith.constant 6 : index
    %175 = memref.load %arg2[%c3_97, %c6_98] : memref<10x10xf32, #tpu.memory_space<smem>>
    %176 = vector.broadcast %175 : f32 to vector<1x128xf32>
    %177 = arith.mulf %176, %13 : vector<1x128xf32>
    %178 = arith.addf %174, %177 : vector<1x128xf32>
    %c3_99 = arith.constant 3 : index
    %c7_100 = arith.constant 7 : index
    %179 = memref.load %arg2[%c3_99, %c7_100] : memref<10x10xf32, #tpu.memory_space<smem>>
    %180 = vector.broadcast %179 : f32 to vector<1x128xf32>
    %181 = arith.mulf %180, %15 : vector<1x128xf32>
    %182 = arith.addf %178, %181 : vector<1x128xf32>
    %c3_101 = arith.constant 3 : index
    %c8_102 = arith.constant 8 : index
    %183 = memref.load %arg2[%c3_101, %c8_102] : memref<10x10xf32, #tpu.memory_space<smem>>
    %184 = vector.broadcast %183 : f32 to vector<1x128xf32>
    %185 = arith.mulf %184, %17 : vector<1x128xf32>
    %186 = arith.addf %182, %185 : vector<1x128xf32>
    %c3_103 = arith.constant 3 : index
    %c9_104 = arith.constant 9 : index
    %187 = memref.load %arg2[%c3_103, %c9_104] : memref<10x10xf32, #tpu.memory_space<smem>>
    %188 = vector.broadcast %187 : f32 to vector<1x128xf32>
    %189 = arith.mulf %188, %19 : vector<1x128xf32>
    %190 = arith.addf %186, %189 : vector<1x128xf32>
    %c3_105 = arith.constant 3 : index
    %191 = memref.load %arg3[%c3_105] : memref<10xf32, #tpu.memory_space<smem>>
    %192 = vector.broadcast %191 : f32 to vector<1x128xf32>
    %193 = arith.addf %190, %192 : vector<1x128xf32>
    %cst_106 = arith.constant 0.000000e+00 : f32
    %194 = vector.broadcast %cst_106 : f32 to vector<1x128xf32>
    %195 = arith.maximumf %193, %194 : vector<1x128xf32>
    %c4_107 = arith.constant 4 : index
    %c0_108 = arith.constant 0 : index
    %196 = memref.load %arg2[%c4_107, %c0_108] : memref<10x10xf32, #tpu.memory_space<smem>>
    %197 = vector.broadcast %196 : f32 to vector<1x128xf32>
    %198 = arith.mulf %197, %1 : vector<1x128xf32>
    %c4_109 = arith.constant 4 : index
    %c1_110 = arith.constant 1 : index
    %199 = memref.load %arg2[%c4_109, %c1_110] : memref<10x10xf32, #tpu.memory_space<smem>>
    %200 = vector.broadcast %199 : f32 to vector<1x128xf32>
    %201 = arith.mulf %200, %3 : vector<1x128xf32>
    %202 = arith.addf %198, %201 : vector<1x128xf32>
    %c4_111 = arith.constant 4 : index
    %c2_112 = arith.constant 2 : index
    %203 = memref.load %arg2[%c4_111, %c2_112] : memref<10x10xf32, #tpu.memory_space<smem>>
    %204 = vector.broadcast %203 : f32 to vector<1x128xf32>
    %205 = arith.mulf %204, %5 : vector<1x128xf32>
    %206 = arith.addf %202, %205 : vector<1x128xf32>
    %c4_113 = arith.constant 4 : index
    %c3_114 = arith.constant 3 : index
    %207 = memref.load %arg2[%c4_113, %c3_114] : memref<10x10xf32, #tpu.memory_space<smem>>
    %208 = vector.broadcast %207 : f32 to vector<1x128xf32>
    %209 = arith.mulf %208, %7 : vector<1x128xf32>
    %210 = arith.addf %206, %209 : vector<1x128xf32>
    %c4_115 = arith.constant 4 : index
    %c4_116 = arith.constant 4 : index
    %211 = memref.load %arg2[%c4_115, %c4_116] : memref<10x10xf32, #tpu.memory_space<smem>>
    %212 = vector.broadcast %211 : f32 to vector<1x128xf32>
    %213 = arith.mulf %212, %9 : vector<1x128xf32>
    %214 = arith.addf %210, %213 : vector<1x128xf32>
    %c4_117 = arith.constant 4 : index
    %c5_118 = arith.constant 5 : index
    %215 = memref.load %arg2[%c4_117, %c5_118] : memref<10x10xf32, #tpu.memory_space<smem>>
    %216 = vector.broadcast %215 : f32 to vector<1x128xf32>
    %217 = arith.mulf %216, %11 : vector<1x128xf32>
    %218 = arith.addf %214, %217 : vector<1x128xf32>
    %c4_119 = arith.constant 4 : index
    %c6_120 = arith.constant 6 : index
    %219 = memref.load %arg2[%c4_119, %c6_120] : memref<10x10xf32, #tpu.memory_space<smem>>
    %220 = vector.broadcast %219 : f32 to vector<1x128xf32>
    %221 = arith.mulf %220, %13 : vector<1x128xf32>
    %222 = arith.addf %218, %221 : vector<1x128xf32>
    %c4_121 = arith.constant 4 : index
    %c7_122 = arith.constant 7 : index
    %223 = memref.load %arg2[%c4_121, %c7_122] : memref<10x10xf32, #tpu.memory_space<smem>>
    %224 = vector.broadcast %223 : f32 to vector<1x128xf32>
    %225 = arith.mulf %224, %15 : vector<1x128xf32>
    %226 = arith.addf %222, %225 : vector<1x128xf32>
    %c4_123 = arith.constant 4 : index
    %c8_124 = arith.constant 8 : index
    %227 = memref.load %arg2[%c4_123, %c8_124] : memref<10x10xf32, #tpu.memory_space<smem>>
    %228 = vector.broadcast %227 : f32 to vector<1x128xf32>
    %229 = arith.mulf %228, %17 : vector<1x128xf32>
    %230 = arith.addf %226, %229 : vector<1x128xf32>
    %c4_125 = arith.constant 4 : index
    %c9_126 = arith.constant 9 : index
    %231 = memref.load %arg2[%c4_125, %c9_126] : memref<10x10xf32, #tpu.memory_space<smem>>
    %232 = vector.broadcast %231 : f32 to vector<1x128xf32>
    %233 = arith.mulf %232, %19 : vector<1x128xf32>
    %234 = arith.addf %230, %233 : vector<1x128xf32>
    %c4_127 = arith.constant 4 : index
    %235 = memref.load %arg3[%c4_127] : memref<10xf32, #tpu.memory_space<smem>>
    %236 = vector.broadcast %235 : f32 to vector<1x128xf32>
    %237 = arith.addf %234, %236 : vector<1x128xf32>
    %cst_128 = arith.constant 0.000000e+00 : f32
    %238 = vector.broadcast %cst_128 : f32 to vector<1x128xf32>
    %239 = arith.maximumf %237, %238 : vector<1x128xf32>
    %c5_129 = arith.constant 5 : index
    %c0_130 = arith.constant 0 : index
    %240 = memref.load %arg2[%c5_129, %c0_130] : memref<10x10xf32, #tpu.memory_space<smem>>
    %241 = vector.broadcast %240 : f32 to vector<1x128xf32>
    %242 = arith.mulf %241, %1 : vector<1x128xf32>
    %c5_131 = arith.constant 5 : index
    %c1_132 = arith.constant 1 : index
    %243 = memref.load %arg2[%c5_131, %c1_132] : memref<10x10xf32, #tpu.memory_space<smem>>
    %244 = vector.broadcast %243 : f32 to vector<1x128xf32>
    %245 = arith.mulf %244, %3 : vector<1x128xf32>
    %246 = arith.addf %242, %245 : vector<1x128xf32>
    %c5_133 = arith.constant 5 : index
    %c2_134 = arith.constant 2 : index
    %247 = memref.load %arg2[%c5_133, %c2_134] : memref<10x10xf32, #tpu.memory_space<smem>>
    %248 = vector.broadcast %247 : f32 to vector<1x128xf32>
    %249 = arith.mulf %248, %5 : vector<1x128xf32>
    %250 = arith.addf %246, %249 : vector<1x128xf32>
    %c5_135 = arith.constant 5 : index
    %c3_136 = arith.constant 3 : index
    %251 = memref.load %arg2[%c5_135, %c3_136] : memref<10x10xf32, #tpu.memory_space<smem>>
    %252 = vector.broadcast %251 : f32 to vector<1x128xf32>
    %253 = arith.mulf %252, %7 : vector<1x128xf32>
    %254 = arith.addf %250, %253 : vector<1x128xf32>
    %c5_137 = arith.constant 5 : index
    %c4_138 = arith.constant 4 : index
    %255 = memref.load %arg2[%c5_137, %c4_138] : memref<10x10xf32, #tpu.memory_space<smem>>
    %256 = vector.broadcast %255 : f32 to vector<1x128xf32>
    %257 = arith.mulf %256, %9 : vector<1x128xf32>
    %258 = arith.addf %254, %257 : vector<1x128xf32>
    %c5_139 = arith.constant 5 : index
    %c5_140 = arith.constant 5 : index
    %259 = memref.load %arg2[%c5_139, %c5_140] : memref<10x10xf32, #tpu.memory_space<smem>>
    %260 = vector.broadcast %259 : f32 to vector<1x128xf32>
    %261 = arith.mulf %260, %11 : vector<1x128xf32>
    %262 = arith.addf %258, %261 : vector<1x128xf32>
    %c5_141 = arith.constant 5 : index
    %c6_142 = arith.constant 6 : index
    %263 = memref.load %arg2[%c5_141, %c6_142] : memref<10x10xf32, #tpu.memory_space<smem>>
    %264 = vector.broadcast %263 : f32 to vector<1x128xf32>
    %265 = arith.mulf %264, %13 : vector<1x128xf32>
    %266 = arith.addf %262, %265 : vector<1x128xf32>
    %c5_143 = arith.constant 5 : index
    %c7_144 = arith.constant 7 : index
    %267 = memref.load %arg2[%c5_143, %c7_144] : memref<10x10xf32, #tpu.memory_space<smem>>
    %268 = vector.broadcast %267 : f32 to vector<1x128xf32>
    %269 = arith.mulf %268, %15 : vector<1x128xf32>
    %270 = arith.addf %266, %269 : vector<1x128xf32>
    %c5_145 = arith.constant 5 : index
    %c8_146 = arith.constant 8 : index
    %271 = memref.load %arg2[%c5_145, %c8_146] : memref<10x10xf32, #tpu.memory_space<smem>>
    %272 = vector.broadcast %271 : f32 to vector<1x128xf32>
    %273 = arith.mulf %272, %17 : vector<1x128xf32>
    %274 = arith.addf %270, %273 : vector<1x128xf32>
    %c5_147 = arith.constant 5 : index
    %c9_148 = arith.constant 9 : index
    %275 = memref.load %arg2[%c5_147, %c9_148] : memref<10x10xf32, #tpu.memory_space<smem>>
    %276 = vector.broadcast %275 : f32 to vector<1x128xf32>
    %277 = arith.mulf %276, %19 : vector<1x128xf32>
    %278 = arith.addf %274, %277 : vector<1x128xf32>
    %c5_149 = arith.constant 5 : index
    %279 = memref.load %arg3[%c5_149] : memref<10xf32, #tpu.memory_space<smem>>
    %280 = vector.broadcast %279 : f32 to vector<1x128xf32>
    %281 = arith.addf %278, %280 : vector<1x128xf32>
    %cst_150 = arith.constant 0.000000e+00 : f32
    %282 = vector.broadcast %cst_150 : f32 to vector<1x128xf32>
    %283 = arith.maximumf %281, %282 : vector<1x128xf32>
    %c6_151 = arith.constant 6 : index
    %c0_152 = arith.constant 0 : index
    %284 = memref.load %arg2[%c6_151, %c0_152] : memref<10x10xf32, #tpu.memory_space<smem>>
    %285 = vector.broadcast %284 : f32 to vector<1x128xf32>
    %286 = arith.mulf %285, %1 : vector<1x128xf32>
    %c6_153 = arith.constant 6 : index
    %c1_154 = arith.constant 1 : index
    %287 = memref.load %arg2[%c6_153, %c1_154] : memref<10x10xf32, #tpu.memory_space<smem>>
    %288 = vector.broadcast %287 : f32 to vector<1x128xf32>
    %289 = arith.mulf %288, %3 : vector<1x128xf32>
    %290 = arith.addf %286, %289 : vector<1x128xf32>
    %c6_155 = arith.constant 6 : index
    %c2_156 = arith.constant 2 : index
    %291 = memref.load %arg2[%c6_155, %c2_156] : memref<10x10xf32, #tpu.memory_space<smem>>
    %292 = vector.broadcast %291 : f32 to vector<1x128xf32>
    %293 = arith.mulf %292, %5 : vector<1x128xf32>
    %294 = arith.addf %290, %293 : vector<1x128xf32>
    %c6_157 = arith.constant 6 : index
    %c3_158 = arith.constant 3 : index
    %295 = memref.load %arg2[%c6_157, %c3_158] : memref<10x10xf32, #tpu.memory_space<smem>>
    %296 = vector.broadcast %295 : f32 to vector<1x128xf32>
    %297 = arith.mulf %296, %7 : vector<1x128xf32>
    %298 = arith.addf %294, %297 : vector<1x128xf32>
    %c6_159 = arith.constant 6 : index
    %c4_160 = arith.constant 4 : index
    %299 = memref.load %arg2[%c6_159, %c4_160] : memref<10x10xf32, #tpu.memory_space<smem>>
    %300 = vector.broadcast %299 : f32 to vector<1x128xf32>
    %301 = arith.mulf %300, %9 : vector<1x128xf32>
    %302 = arith.addf %298, %301 : vector<1x128xf32>
    %c6_161 = arith.constant 6 : index
    %c5_162 = arith.constant 5 : index
    %303 = memref.load %arg2[%c6_161, %c5_162] : memref<10x10xf32, #tpu.memory_space<smem>>
    %304 = vector.broadcast %303 : f32 to vector<1x128xf32>
    %305 = arith.mulf %304, %11 : vector<1x128xf32>
    %306 = arith.addf %302, %305 : vector<1x128xf32>
    %c6_163 = arith.constant 6 : index
    %c6_164 = arith.constant 6 : index
    %307 = memref.load %arg2[%c6_163, %c6_164] : memref<10x10xf32, #tpu.memory_space<smem>>
    %308 = vector.broadcast %307 : f32 to vector<1x128xf32>
    %309 = arith.mulf %308, %13 : vector<1x128xf32>
    %310 = arith.addf %306, %309 : vector<1x128xf32>
    %c6_165 = arith.constant 6 : index
    %c7_166 = arith.constant 7 : index
    %311 = memref.load %arg2[%c6_165, %c7_166] : memref<10x10xf32, #tpu.memory_space<smem>>
    %312 = vector.broadcast %311 : f32 to vector<1x128xf32>
    %313 = arith.mulf %312, %15 : vector<1x128xf32>
    %314 = arith.addf %310, %313 : vector<1x128xf32>
    %c6_167 = arith.constant 6 : index
    %c8_168 = arith.constant 8 : index
    %315 = memref.load %arg2[%c6_167, %c8_168] : memref<10x10xf32, #tpu.memory_space<smem>>
    %316 = vector.broadcast %315 : f32 to vector<1x128xf32>
    %317 = arith.mulf %316, %17 : vector<1x128xf32>
    %318 = arith.addf %314, %317 : vector<1x128xf32>
    %c6_169 = arith.constant 6 : index
    %c9_170 = arith.constant 9 : index
    %319 = memref.load %arg2[%c6_169, %c9_170] : memref<10x10xf32, #tpu.memory_space<smem>>
    %320 = vector.broadcast %319 : f32 to vector<1x128xf32>
    %321 = arith.mulf %320, %19 : vector<1x128xf32>
    %322 = arith.addf %318, %321 : vector<1x128xf32>
    %c6_171 = arith.constant 6 : index
    %323 = memref.load %arg3[%c6_171] : memref<10xf32, #tpu.memory_space<smem>>
    %324 = vector.broadcast %323 : f32 to vector<1x128xf32>
    %325 = arith.addf %322, %324 : vector<1x128xf32>
    %cst_172 = arith.constant 0.000000e+00 : f32
    %326 = vector.broadcast %cst_172 : f32 to vector<1x128xf32>
    %327 = arith.maximumf %325, %326 : vector<1x128xf32>
    %c7_173 = arith.constant 7 : index
    %c0_174 = arith.constant 0 : index
    %328 = memref.load %arg2[%c7_173, %c0_174] : memref<10x10xf32, #tpu.memory_space<smem>>
    %329 = vector.broadcast %328 : f32 to vector<1x128xf32>
    %330 = arith.mulf %329, %1 : vector<1x128xf32>
    %c7_175 = arith.constant 7 : index
    %c1_176 = arith.constant 1 : index
    %331 = memref.load %arg2[%c7_175, %c1_176] : memref<10x10xf32, #tpu.memory_space<smem>>
    %332 = vector.broadcast %331 : f32 to vector<1x128xf32>
    %333 = arith.mulf %332, %3 : vector<1x128xf32>
    %334 = arith.addf %330, %333 : vector<1x128xf32>
    %c7_177 = arith.constant 7 : index
    %c2_178 = arith.constant 2 : index
    %335 = memref.load %arg2[%c7_177, %c2_178] : memref<10x10xf32, #tpu.memory_space<smem>>
    %336 = vector.broadcast %335 : f32 to vector<1x128xf32>
    %337 = arith.mulf %336, %5 : vector<1x128xf32>
    %338 = arith.addf %334, %337 : vector<1x128xf32>
    %c7_179 = arith.constant 7 : index
    %c3_180 = arith.constant 3 : index
    %339 = memref.load %arg2[%c7_179, %c3_180] : memref<10x10xf32, #tpu.memory_space<smem>>
    %340 = vector.broadcast %339 : f32 to vector<1x128xf32>
    %341 = arith.mulf %340, %7 : vector<1x128xf32>
    %342 = arith.addf %338, %341 : vector<1x128xf32>
    %c7_181 = arith.constant 7 : index
    %c4_182 = arith.constant 4 : index
    %343 = memref.load %arg2[%c7_181, %c4_182] : memref<10x10xf32, #tpu.memory_space<smem>>
    %344 = vector.broadcast %343 : f32 to vector<1x128xf32>
    %345 = arith.mulf %344, %9 : vector<1x128xf32>
    %346 = arith.addf %342, %345 : vector<1x128xf32>
    %c7_183 = arith.constant 7 : index
    %c5_184 = arith.constant 5 : index
    %347 = memref.load %arg2[%c7_183, %c5_184] : memref<10x10xf32, #tpu.memory_space<smem>>
    %348 = vector.broadcast %347 : f32 to vector<1x128xf32>
    %349 = arith.mulf %348, %11 : vector<1x128xf32>
    %350 = arith.addf %346, %349 : vector<1x128xf32>
    %c7_185 = arith.constant 7 : index
    %c6_186 = arith.constant 6 : index
    %351 = memref.load %arg2[%c7_185, %c6_186] : memref<10x10xf32, #tpu.memory_space<smem>>
    %352 = vector.broadcast %351 : f32 to vector<1x128xf32>
    %353 = arith.mulf %352, %13 : vector<1x128xf32>
    %354 = arith.addf %350, %353 : vector<1x128xf32>
    %c7_187 = arith.constant 7 : index
    %c7_188 = arith.constant 7 : index
    %355 = memref.load %arg2[%c7_187, %c7_188] : memref<10x10xf32, #tpu.memory_space<smem>>
    %356 = vector.broadcast %355 : f32 to vector<1x128xf32>
    %357 = arith.mulf %356, %15 : vector<1x128xf32>
    %358 = arith.addf %354, %357 : vector<1x128xf32>
    %c7_189 = arith.constant 7 : index
    %c8_190 = arith.constant 8 : index
    %359 = memref.load %arg2[%c7_189, %c8_190] : memref<10x10xf32, #tpu.memory_space<smem>>
    %360 = vector.broadcast %359 : f32 to vector<1x128xf32>
    %361 = arith.mulf %360, %17 : vector<1x128xf32>
    %362 = arith.addf %358, %361 : vector<1x128xf32>
    %c7_191 = arith.constant 7 : index
    %c9_192 = arith.constant 9 : index
    %363 = memref.load %arg2[%c7_191, %c9_192] : memref<10x10xf32, #tpu.memory_space<smem>>
    %364 = vector.broadcast %363 : f32 to vector<1x128xf32>
    %365 = arith.mulf %364, %19 : vector<1x128xf32>
    %366 = arith.addf %362, %365 : vector<1x128xf32>
    %c7_193 = arith.constant 7 : index
    %367 = memref.load %arg3[%c7_193] : memref<10xf32, #tpu.memory_space<smem>>
    %368 = vector.broadcast %367 : f32 to vector<1x128xf32>
    %369 = arith.addf %366, %368 : vector<1x128xf32>
    %cst_194 = arith.constant 0.000000e+00 : f32
    %370 = vector.broadcast %cst_194 : f32 to vector<1x128xf32>
    %371 = arith.maximumf %369, %370 : vector<1x128xf32>
    %c8_195 = arith.constant 8 : index
    %c0_196 = arith.constant 0 : index
    %372 = memref.load %arg2[%c8_195, %c0_196] : memref<10x10xf32, #tpu.memory_space<smem>>
    %373 = vector.broadcast %372 : f32 to vector<1x128xf32>
    %374 = arith.mulf %373, %1 : vector<1x128xf32>
    %c8_197 = arith.constant 8 : index
    %c1_198 = arith.constant 1 : index
    %375 = memref.load %arg2[%c8_197, %c1_198] : memref<10x10xf32, #tpu.memory_space<smem>>
    %376 = vector.broadcast %375 : f32 to vector<1x128xf32>
    %377 = arith.mulf %376, %3 : vector<1x128xf32>
    %378 = arith.addf %374, %377 : vector<1x128xf32>
    %c8_199 = arith.constant 8 : index
    %c2_200 = arith.constant 2 : index
    %379 = memref.load %arg2[%c8_199, %c2_200] : memref<10x10xf32, #tpu.memory_space<smem>>
    %380 = vector.broadcast %379 : f32 to vector<1x128xf32>
    %381 = arith.mulf %380, %5 : vector<1x128xf32>
    %382 = arith.addf %378, %381 : vector<1x128xf32>
    %c8_201 = arith.constant 8 : index
    %c3_202 = arith.constant 3 : index
    %383 = memref.load %arg2[%c8_201, %c3_202] : memref<10x10xf32, #tpu.memory_space<smem>>
    %384 = vector.broadcast %383 : f32 to vector<1x128xf32>
    %385 = arith.mulf %384, %7 : vector<1x128xf32>
    %386 = arith.addf %382, %385 : vector<1x128xf32>
    %c8_203 = arith.constant 8 : index
    %c4_204 = arith.constant 4 : index
    %387 = memref.load %arg2[%c8_203, %c4_204] : memref<10x10xf32, #tpu.memory_space<smem>>
    %388 = vector.broadcast %387 : f32 to vector<1x128xf32>
    %389 = arith.mulf %388, %9 : vector<1x128xf32>
    %390 = arith.addf %386, %389 : vector<1x128xf32>
    %c8_205 = arith.constant 8 : index
    %c5_206 = arith.constant 5 : index
    %391 = memref.load %arg2[%c8_205, %c5_206] : memref<10x10xf32, #tpu.memory_space<smem>>
    %392 = vector.broadcast %391 : f32 to vector<1x128xf32>
    %393 = arith.mulf %392, %11 : vector<1x128xf32>
    %394 = arith.addf %390, %393 : vector<1x128xf32>
    %c8_207 = arith.constant 8 : index
    %c6_208 = arith.constant 6 : index
    %395 = memref.load %arg2[%c8_207, %c6_208] : memref<10x10xf32, #tpu.memory_space<smem>>
    %396 = vector.broadcast %395 : f32 to vector<1x128xf32>
    %397 = arith.mulf %396, %13 : vector<1x128xf32>
    %398 = arith.addf %394, %397 : vector<1x128xf32>
    %c8_209 = arith.constant 8 : index
    %c7_210 = arith.constant 7 : index
    %399 = memref.load %arg2[%c8_209, %c7_210] : memref<10x10xf32, #tpu.memory_space<smem>>
    %400 = vector.broadcast %399 : f32 to vector<1x128xf32>
    %401 = arith.mulf %400, %15 : vector<1x128xf32>
    %402 = arith.addf %398, %401 : vector<1x128xf32>
    %c8_211 = arith.constant 8 : index
    %c8_212 = arith.constant 8 : index
    %403 = memref.load %arg2[%c8_211, %c8_212] : memref<10x10xf32, #tpu.memory_space<smem>>
    %404 = vector.broadcast %403 : f32 to vector<1x128xf32>
    %405 = arith.mulf %404, %17 : vector<1x128xf32>
    %406 = arith.addf %402, %405 : vector<1x128xf32>
    %c8_213 = arith.constant 8 : index
    %c9_214 = arith.constant 9 : index
    %407 = memref.load %arg2[%c8_213, %c9_214] : memref<10x10xf32, #tpu.memory_space<smem>>
    %408 = vector.broadcast %407 : f32 to vector<1x128xf32>
    %409 = arith.mulf %408, %19 : vector<1x128xf32>
    %410 = arith.addf %406, %409 : vector<1x128xf32>
    %c8_215 = arith.constant 8 : index
    %411 = memref.load %arg3[%c8_215] : memref<10xf32, #tpu.memory_space<smem>>
    %412 = vector.broadcast %411 : f32 to vector<1x128xf32>
    %413 = arith.addf %410, %412 : vector<1x128xf32>
    %cst_216 = arith.constant 0.000000e+00 : f32
    %414 = vector.broadcast %cst_216 : f32 to vector<1x128xf32>
    %415 = arith.maximumf %413, %414 : vector<1x128xf32>
    %c9_217 = arith.constant 9 : index
    %c0_218 = arith.constant 0 : index
    %416 = memref.load %arg2[%c9_217, %c0_218] : memref<10x10xf32, #tpu.memory_space<smem>>
    %417 = vector.broadcast %416 : f32 to vector<1x128xf32>
    %418 = arith.mulf %417, %1 : vector<1x128xf32>
    %c9_219 = arith.constant 9 : index
    %c1_220 = arith.constant 1 : index
    %419 = memref.load %arg2[%c9_219, %c1_220] : memref<10x10xf32, #tpu.memory_space<smem>>
    %420 = vector.broadcast %419 : f32 to vector<1x128xf32>
    %421 = arith.mulf %420, %3 : vector<1x128xf32>
    %422 = arith.addf %418, %421 : vector<1x128xf32>
    %c9_221 = arith.constant 9 : index
    %c2_222 = arith.constant 2 : index
    %423 = memref.load %arg2[%c9_221, %c2_222] : memref<10x10xf32, #tpu.memory_space<smem>>
    %424 = vector.broadcast %423 : f32 to vector<1x128xf32>
    %425 = arith.mulf %424, %5 : vector<1x128xf32>
    %426 = arith.addf %422, %425 : vector<1x128xf32>
    %c9_223 = arith.constant 9 : index
    %c3_224 = arith.constant 3 : index
    %427 = memref.load %arg2[%c9_223, %c3_224] : memref<10x10xf32, #tpu.memory_space<smem>>
    %428 = vector.broadcast %427 : f32 to vector<1x128xf32>
    %429 = arith.mulf %428, %7 : vector<1x128xf32>
    %430 = arith.addf %426, %429 : vector<1x128xf32>
    %c9_225 = arith.constant 9 : index
    %c4_226 = arith.constant 4 : index
    %431 = memref.load %arg2[%c9_225, %c4_226] : memref<10x10xf32, #tpu.memory_space<smem>>
    %432 = vector.broadcast %431 : f32 to vector<1x128xf32>
    %433 = arith.mulf %432, %9 : vector<1x128xf32>
    %434 = arith.addf %430, %433 : vector<1x128xf32>
    %c9_227 = arith.constant 9 : index
    %c5_228 = arith.constant 5 : index
    %435 = memref.load %arg2[%c9_227, %c5_228] : memref<10x10xf32, #tpu.memory_space<smem>>
    %436 = vector.broadcast %435 : f32 to vector<1x128xf32>
    %437 = arith.mulf %436, %11 : vector<1x128xf32>
    %438 = arith.addf %434, %437 : vector<1x128xf32>
    %c9_229 = arith.constant 9 : index
    %c6_230 = arith.constant 6 : index
    %439 = memref.load %arg2[%c9_229, %c6_230] : memref<10x10xf32, #tpu.memory_space<smem>>
    %440 = vector.broadcast %439 : f32 to vector<1x128xf32>
    %441 = arith.mulf %440, %13 : vector<1x128xf32>
    %442 = arith.addf %438, %441 : vector<1x128xf32>
    %c9_231 = arith.constant 9 : index
    %c7_232 = arith.constant 7 : index
    %443 = memref.load %arg2[%c9_231, %c7_232] : memref<10x10xf32, #tpu.memory_space<smem>>
    %444 = vector.broadcast %443 : f32 to vector<1x128xf32>
    %445 = arith.mulf %444, %15 : vector<1x128xf32>
    %446 = arith.addf %442, %445 : vector<1x128xf32>
    %c9_233 = arith.constant 9 : index
    %c8_234 = arith.constant 8 : index
    %447 = memref.load %arg2[%c9_233, %c8_234] : memref<10x10xf32, #tpu.memory_space<smem>>
    %448 = vector.broadcast %447 : f32 to vector<1x128xf32>
    %449 = arith.mulf %448, %17 : vector<1x128xf32>
    %450 = arith.addf %446, %449 : vector<1x128xf32>
    %c9_235 = arith.constant 9 : index
    %c9_236 = arith.constant 9 : index
    %451 = memref.load %arg2[%c9_235, %c9_236] : memref<10x10xf32, #tpu.memory_space<smem>>
    %452 = vector.broadcast %451 : f32 to vector<1x128xf32>
    %453 = arith.mulf %452, %19 : vector<1x128xf32>
    %454 = arith.addf %450, %453 : vector<1x128xf32>
    %c9_237 = arith.constant 9 : index
    %455 = memref.load %arg3[%c9_237] : memref<10xf32, #tpu.memory_space<smem>>
    %456 = vector.broadcast %455 : f32 to vector<1x128xf32>
    %457 = arith.addf %454, %456 : vector<1x128xf32>
    %cst_238 = arith.constant 0.000000e+00 : f32
    %458 = vector.broadcast %cst_238 : f32 to vector<1x128xf32>
    %459 = arith.maximumf %457, %458 : vector<1x128xf32>
    %c0_239 = arith.constant 0 : index
    %c0_240 = arith.constant 0 : index
    %460 = memref.load %arg4[%c0_239, %c0_240] : memref<10x10xf32, #tpu.memory_space<smem>>
    %461 = vector.broadcast %460 : f32 to vector<1x128xf32>
    %462 = arith.mulf %461, %63 : vector<1x128xf32>
    %c0_241 = arith.constant 0 : index
    %c1_242 = arith.constant 1 : index
    %463 = memref.load %arg4[%c0_241, %c1_242] : memref<10x10xf32, #tpu.memory_space<smem>>
    %464 = vector.broadcast %463 : f32 to vector<1x128xf32>
    %465 = arith.mulf %464, %107 : vector<1x128xf32>
    %466 = arith.addf %462, %465 : vector<1x128xf32>
    %c0_243 = arith.constant 0 : index
    %c2_244 = arith.constant 2 : index
    %467 = memref.load %arg4[%c0_243, %c2_244] : memref<10x10xf32, #tpu.memory_space<smem>>
    %468 = vector.broadcast %467 : f32 to vector<1x128xf32>
    %469 = arith.mulf %468, %151 : vector<1x128xf32>
    %470 = arith.addf %466, %469 : vector<1x128xf32>
    %c0_245 = arith.constant 0 : index
    %c3_246 = arith.constant 3 : index
    %471 = memref.load %arg4[%c0_245, %c3_246] : memref<10x10xf32, #tpu.memory_space<smem>>
    %472 = vector.broadcast %471 : f32 to vector<1x128xf32>
    %473 = arith.mulf %472, %195 : vector<1x128xf32>
    %474 = arith.addf %470, %473 : vector<1x128xf32>
    %c0_247 = arith.constant 0 : index
    %c4_248 = arith.constant 4 : index
    %475 = memref.load %arg4[%c0_247, %c4_248] : memref<10x10xf32, #tpu.memory_space<smem>>
    %476 = vector.broadcast %475 : f32 to vector<1x128xf32>
    %477 = arith.mulf %476, %239 : vector<1x128xf32>
    %478 = arith.addf %474, %477 : vector<1x128xf32>
    %c0_249 = arith.constant 0 : index
    %c5_250 = arith.constant 5 : index
    %479 = memref.load %arg4[%c0_249, %c5_250] : memref<10x10xf32, #tpu.memory_space<smem>>
    %480 = vector.broadcast %479 : f32 to vector<1x128xf32>
    %481 = arith.mulf %480, %283 : vector<1x128xf32>
    %482 = arith.addf %478, %481 : vector<1x128xf32>
    %c0_251 = arith.constant 0 : index
    %c6_252 = arith.constant 6 : index
    %483 = memref.load %arg4[%c0_251, %c6_252] : memref<10x10xf32, #tpu.memory_space<smem>>
    %484 = vector.broadcast %483 : f32 to vector<1x128xf32>
    %485 = arith.mulf %484, %327 : vector<1x128xf32>
    %486 = arith.addf %482, %485 : vector<1x128xf32>
    %c0_253 = arith.constant 0 : index
    %c7_254 = arith.constant 7 : index
    %487 = memref.load %arg4[%c0_253, %c7_254] : memref<10x10xf32, #tpu.memory_space<smem>>
    %488 = vector.broadcast %487 : f32 to vector<1x128xf32>
    %489 = arith.mulf %488, %371 : vector<1x128xf32>
    %490 = arith.addf %486, %489 : vector<1x128xf32>
    %c0_255 = arith.constant 0 : index
    %c8_256 = arith.constant 8 : index
    %491 = memref.load %arg4[%c0_255, %c8_256] : memref<10x10xf32, #tpu.memory_space<smem>>
    %492 = vector.broadcast %491 : f32 to vector<1x128xf32>
    %493 = arith.mulf %492, %415 : vector<1x128xf32>
    %494 = arith.addf %490, %493 : vector<1x128xf32>
    %c0_257 = arith.constant 0 : index
    %c9_258 = arith.constant 9 : index
    %495 = memref.load %arg4[%c0_257, %c9_258] : memref<10x10xf32, #tpu.memory_space<smem>>
    %496 = vector.broadcast %495 : f32 to vector<1x128xf32>
    %497 = arith.mulf %496, %459 : vector<1x128xf32>
    %498 = arith.addf %494, %497 : vector<1x128xf32>
    %c0_259 = arith.constant 0 : index
    %499 = memref.load %arg5[%c0_259] : memref<10xf32, #tpu.memory_space<smem>>
    %500 = vector.broadcast %499 : f32 to vector<1x128xf32>
    %501 = arith.addf %498, %500 : vector<1x128xf32>
    %cst_260 = arith.constant 5.000000e-01 : f32
    %502 = vector.broadcast %cst_260 : f32 to vector<1x128xf32>
    %503 = arith.mulf %502, %501 : vector<1x128xf32>
    %504 = math.tanh %503 : vector<1x128xf32>
    %cst_261 = arith.constant 1.000000e+00 : f32
    %505 = vector.broadcast %cst_261 : f32 to vector<1x128xf32>
    %506 = arith.addf %504, %505 : vector<1x128xf32>
    %cst_262 = arith.constant 5.000000e-01 : f32
    %507 = vector.broadcast %cst_262 : f32 to vector<1x128xf32>
    %508 = arith.mulf %507, %506 : vector<1x128xf32>
    %c0_263 = arith.constant 0 : index
    %c0_264 = arith.constant 0 : index
    %c0_265 = arith.constant 0 : index
    %509 = vector.load %arg6[%c0_263, %c0_264, %c0_265] : memref<10x1x128xf32, #tpu.memory_space<vmem>>, vector<1x1x128xf32>
    %510 = vector.shape_cast %509 : vector<1x1x128xf32> to vector<1x128xf32>
    %511 = vector.shape_cast %508 : vector<1x128xf32> to vector<1x1x128xf32>
    tpu.vector_store %arg6[%c0_263, %c0_264, %c0_265], %511 {strides = array<i32>} : memref<10x1x128xf32, #tpu.memory_space<vmem>>, vector<1x1x128xf32>,
    %c1_266 = arith.constant 1 : index
    %c0_267 = arith.constant 0 : index
    %512 = memref.load %arg4[%c1_266, %c0_267] : memref<10x10xf32, #tpu.memory_space<smem>>
    %513 = vector.broadcast %512 : f32 to vector<1x128xf32>
    %514 = arith.mulf %513, %63 : vector<1x128xf32>
    %c1_268 = arith.constant 1 : index
    %c1_269 = arith.constant 1 : index
    %515 = memref.load %arg4[%c1_268, %c1_269] : memref<10x10xf32, #tpu.memory_space<smem>>
    %516 = vector.broadcast %515 : f32 to vector<1x128xf32>
    %517 = arith.mulf %516, %107 : vector<1x128xf32>
    %518 = arith.addf %514, %517 : vector<1x128xf32>
    %c1_270 = arith.constant 1 : index
    %c2_271 = arith.constant 2 : index
    %519 = memref.load %arg4[%c1_270, %c2_271] : memref<10x10xf32, #tpu.memory_space<smem>>
    %520 = vector.broadcast %519 : f32 to vector<1x128xf32>
    %521 = arith.mulf %520, %151 : vector<1x128xf32>
    %522 = arith.addf %518, %521 : vector<1x128xf32>
    %c1_272 = arith.constant 1 : index
    %c3_273 = arith.constant 3 : index
    %523 = memref.load %arg4[%c1_272, %c3_273] : memref<10x10xf32, #tpu.memory_space<smem>>
    %524 = vector.broadcast %523 : f32 to vector<1x128xf32>
    %525 = arith.mulf %524, %195 : vector<1x128xf32>
    %526 = arith.addf %522, %525 : vector<1x128xf32>
    %c1_274 = arith.constant 1 : index
    %c4_275 = arith.constant 4 : index
    %527 = memref.load %arg4[%c1_274, %c4_275] : memref<10x10xf32, #tpu.memory_space<smem>>
    %528 = vector.broadcast %527 : f32 to vector<1x128xf32>
    %529 = arith.mulf %528, %239 : vector<1x128xf32>
    %530 = arith.addf %526, %529 : vector<1x128xf32>
    %c1_276 = arith.constant 1 : index
    %c5_277 = arith.constant 5 : index
    %531 = memref.load %arg4[%c1_276, %c5_277] : memref<10x10xf32, #tpu.memory_space<smem>>
    %532 = vector.broadcast %531 : f32 to vector<1x128xf32>
    %533 = arith.mulf %532, %283 : vector<1x128xf32>
    %534 = arith.addf %530, %533 : vector<1x128xf32>
    %c1_278 = arith.constant 1 : index
    %c6_279 = arith.constant 6 : index
    %535 = memref.load %arg4[%c1_278, %c6_279] : memref<10x10xf32, #tpu.memory_space<smem>>
    %536 = vector.broadcast %535 : f32 to vector<1x128xf32>
    %537 = arith.mulf %536, %327 : vector<1x128xf32>
    %538 = arith.addf %534, %537 : vector<1x128xf32>
    %c1_280 = arith.constant 1 : index
    %c7_281 = arith.constant 7 : index
    %539 = memref.load %arg4[%c1_280, %c7_281] : memref<10x10xf32, #tpu.memory_space<smem>>
    %540 = vector.broadcast %539 : f32 to vector<1x128xf32>
    %541 = arith.mulf %540, %371 : vector<1x128xf32>
    %542 = arith.addf %538, %541 : vector<1x128xf32>
    %c1_282 = arith.constant 1 : index
    %c8_283 = arith.constant 8 : index
    %543 = memref.load %arg4[%c1_282, %c8_283] : memref<10x10xf32, #tpu.memory_space<smem>>
    %544 = vector.broadcast %543 : f32 to vector<1x128xf32>
    %545 = arith.mulf %544, %415 : vector<1x128xf32>
    %546 = arith.addf %542, %545 : vector<1x128xf32>
    %c1_284 = arith.constant 1 : index
    %c9_285 = arith.constant 9 : index
    %547 = memref.load %arg4[%c1_284, %c9_285] : memref<10x10xf32, #tpu.memory_space<smem>>
    %548 = vector.broadcast %547 : f32 to vector<1x128xf32>
    %549 = arith.mulf %548, %459 : vector<1x128xf32>
    %550 = arith.addf %546, %549 : vector<1x128xf32>
    %c1_286 = arith.constant 1 : index
    %551 = memref.load %arg5[%c1_286] : memref<10xf32, #tpu.memory_space<smem>>
    %552 = vector.broadcast %551 : f32 to vector<1x128xf32>
    %553 = arith.addf %550, %552 : vector<1x128xf32>
    %cst_287 = arith.constant 5.000000e-01 : f32
    %554 = vector.broadcast %cst_287 : f32 to vector<1x128xf32>
    %555 = arith.mulf %554, %553 : vector<1x128xf32>
    %556 = math.tanh %555 : vector<1x128xf32>
    %cst_288 = arith.constant 1.000000e+00 : f32
    %557 = vector.broadcast %cst_288 : f32 to vector<1x128xf32>
    %558 = arith.addf %556, %557 : vector<1x128xf32>
    %cst_289 = arith.constant 5.000000e-01 : f32
    %559 = vector.broadcast %cst_289 : f32 to vector<1x128xf32>
    %560 = arith.mulf %559, %558 : vector<1x128xf32>
    %c1_290 = arith.constant 1 : index
    %c0_291 = arith.constant 0 : index
    %c0_292 = arith.constant 0 : index
    %561 = vector.load %arg6[%c1_290, %c0_291, %c0_292] : memref<10x1x128xf32, #tpu.memory_space<vmem>>, vector<1x1x128xf32>
    %562 = vector.shape_cast %561 : vector<1x1x128xf32> to vector<1x128xf32>
    %563 = vector.shape_cast %560 : vector<1x128xf32> to vector<1x1x128xf32>
    tpu.vector_store %arg6[%c1_290, %c0_291, %c0_292], %563 {strides = array<i32>} : memref<10x1x128xf32, #tpu.memory_space<vmem>>, vector<1x1x128xf32>,
    %c2_293 = arith.constant 2 : index
    %c0_294 = arith.constant 0 : index
    %564 = memref.load %arg4[%c2_293, %c0_294] : memref<10x10xf32, #tpu.memory_space<smem>>
    %565 = vector.broadcast %564 : f32 to vector<1x128xf32>
    %566 = arith.mulf %565, %63 : vector<1x128xf32>
    %c2_295 = arith.constant 2 : index
    %c1_296 = arith.constant 1 : index
    %567 = memref.load %arg4[%c2_295, %c1_296] : memref<10x10xf32, #tpu.memory_space<smem>>
    %568 = vector.broadcast %567 : f32 to vector<1x128xf32>
    %569 = arith.mulf %568, %107 : vector<1x128xf32>
    %570 = arith.addf %566, %569 : vector<1x128xf32>
    %c2_297 = arith.constant 2 : index
    %c2_298 = arith.constant 2 : index
    %571 = memref.load %arg4[%c2_297, %c2_298] : memref<10x10xf32, #tpu.memory_space<smem>>
    %572 = vector.broadcast %571 : f32 to vector<1x128xf32>
    %573 = arith.mulf %572, %151 : vector<1x128xf32>
    %574 = arith.addf %570, %573 : vector<1x128xf32>
    %c2_299 = arith.constant 2 : index
    %c3_300 = arith.constant 3 : index
    %575 = memref.load %arg4[%c2_299, %c3_300] : memref<10x10xf32, #tpu.memory_space<smem>>
    %576 = vector.broadcast %575 : f32 to vector<1x128xf32>
    %577 = arith.mulf %576, %195 : vector<1x128xf32>
    %578 = arith.addf %574, %577 : vector<1x128xf32>
    %c2_301 = arith.constant 2 : index
    %c4_302 = arith.constant 4 : index
    %579 = memref.load %arg4[%c2_301, %c4_302] : memref<10x10xf32, #tpu.memory_space<smem>>
    %580 = vector.broadcast %579 : f32 to vector<1x128xf32>
    %581 = arith.mulf %580, %239 : vector<1x128xf32>
    %582 = arith.addf %578, %581 : vector<1x128xf32>
    %c2_303 = arith.constant 2 : index
    %c5_304 = arith.constant 5 : index
    %583 = memref.load %arg4[%c2_303, %c5_304] : memref<10x10xf32, #tpu.memory_space<smem>>
    %584 = vector.broadcast %583 : f32 to vector<1x128xf32>
    %585 = arith.mulf %584, %283 : vector<1x128xf32>
    %586 = arith.addf %582, %585 : vector<1x128xf32>
    %c2_305 = arith.constant 2 : index
    %c6_306 = arith.constant 6 : index
    %587 = memref.load %arg4[%c2_305, %c6_306] : memref<10x10xf32, #tpu.memory_space<smem>>
    %588 = vector.broadcast %587 : f32 to vector<1x128xf32>
    %589 = arith.mulf %588, %327 : vector<1x128xf32>
    %590 = arith.addf %586, %589 : vector<1x128xf32>
    %c2_307 = arith.constant 2 : index
    %c7_308 = arith.constant 7 : index
    %591 = memref.load %arg4[%c2_307, %c7_308] : memref<10x10xf32, #tpu.memory_space<smem>>
    %592 = vector.broadcast %591 : f32 to vector<1x128xf32>
    %593 = arith.mulf %592, %371 : vector<1x128xf32>
    %594 = arith.addf %590, %593 : vector<1x128xf32>
    %c2_309 = arith.constant 2 : index
    %c8_310 = arith.constant 8 : index
    %595 = memref.load %arg4[%c2_309, %c8_310] : memref<10x10xf32, #tpu.memory_space<smem>>
    %596 = vector.broadcast %595 : f32 to vector<1x128xf32>
    %597 = arith.mulf %596, %415 : vector<1x128xf32>
    %598 = arith.addf %594, %597 : vector<1x128xf32>
    %c2_311 = arith.constant 2 : index
    %c9_312 = arith.constant 9 : index
    %599 = memref.load %arg4[%c2_311, %c9_312] : memref<10x10xf32, #tpu.memory_space<smem>>
    %600 = vector.broadcast %599 : f32 to vector<1x128xf32>
    %601 = arith.mulf %600, %459 : vector<1x128xf32>
    %602 = arith.addf %598, %601 : vector<1x128xf32>
    %c2_313 = arith.constant 2 : index
    %603 = memref.load %arg5[%c2_313] : memref<10xf32, #tpu.memory_space<smem>>
    %604 = vector.broadcast %603 : f32 to vector<1x128xf32>
    %605 = arith.addf %602, %604 : vector<1x128xf32>
    %cst_314 = arith.constant 5.000000e-01 : f32
    %606 = vector.broadcast %cst_314 : f32 to vector<1x128xf32>
    %607 = arith.mulf %606, %605 : vector<1x128xf32>
    %608 = math.tanh %607 : vector<1x128xf32>
    %cst_315 = arith.constant 1.000000e+00 : f32
    %609 = vector.broadcast %cst_315 : f32 to vector<1x128xf32>
    %610 = arith.addf %608, %609 : vector<1x128xf32>
    %cst_316 = arith.constant 5.000000e-01 : f32
    %611 = vector.broadcast %cst_316 : f32 to vector<1x128xf32>
    %612 = arith.mulf %611, %610 : vector<1x128xf32>
    %c2_317 = arith.constant 2 : index
    %c0_318 = arith.constant 0 : index
    %c0_319 = arith.constant 0 : index
    %613 = vector.load %arg6[%c2_317, %c0_318, %c0_319] : memref<10x1x128xf32, #tpu.memory_space<vmem>>, vector<1x1x128xf32>
    %614 = vector.shape_cast %613 : vector<1x1x128xf32> to vector<1x128xf32>
    %615 = vector.shape_cast %612 : vector<1x128xf32> to vector<1x1x128xf32>
    tpu.vector_store %arg6[%c2_317, %c0_318, %c0_319], %615 {strides = array<i32>} : memref<10x1x128xf32, #tpu.memory_space<vmem>>, vector<1x1x128xf32>,
    %c3_320 = arith.constant 3 : index
    %c0_321 = arith.constant 0 : index
    %616 = memref.load %arg4[%c3_320, %c0_321] : memref<10x10xf32, #tpu.memory_space<smem>>
    %617 = vector.broadcast %616 : f32 to vector<1x128xf32>
    %618 = arith.mulf %617, %63 : vector<1x128xf32>
    %c3_322 = arith.constant 3 : index
    %c1_323 = arith.constant 1 : index
    %619 = memref.load %arg4[%c3_322, %c1_323] : memref<10x10xf32, #tpu.memory_space<smem>>
    %620 = vector.broadcast %619 : f32 to vector<1x128xf32>
    %621 = arith.mulf %620, %107 : vector<1x128xf32>
    %622 = arith.addf %618, %621 : vector<1x128xf32>
    %c3_324 = arith.constant 3 : index
    %c2_325 = arith.constant 2 : index
    %623 = memref.load %arg4[%c3_324, %c2_325] : memref<10x10xf32, #tpu.memory_space<smem>>
    %624 = vector.broadcast %623 : f32 to vector<1x128xf32>
    %625 = arith.mulf %624, %151 : vector<1x128xf32>
    %626 = arith.addf %622, %625 : vector<1x128xf32>
    %c3_326 = arith.constant 3 : index
    %c3_327 = arith.constant 3 : index
    %627 = memref.load %arg4[%c3_326, %c3_327] : memref<10x10xf32, #tpu.memory_space<smem>>
    %628 = vector.broadcast %627 : f32 to vector<1x128xf32>
    %629 = arith.mulf %628, %195 : vector<1x128xf32>
    %630 = arith.addf %626, %629 : vector<1x128xf32>
    %c3_328 = arith.constant 3 : index
    %c4_329 = arith.constant 4 : index
    %631 = memref.load %arg4[%c3_328, %c4_329] : memref<10x10xf32, #tpu.memory_space<smem>>
    %632 = vector.broadcast %631 : f32 to vector<1x128xf32>
    %633 = arith.mulf %632, %239 : vector<1x128xf32>
    %634 = arith.addf %630, %633 : vector<1x128xf32>
    %c3_330 = arith.constant 3 : index
    %c5_331 = arith.constant 5 : index
    %635 = memref.load %arg4[%c3_330, %c5_331] : memref<10x10xf32, #tpu.memory_space<smem>>
    %636 = vector.broadcast %635 : f32 to vector<1x128xf32>
    %637 = arith.mulf %636, %283 : vector<1x128xf32>
    %638 = arith.addf %634, %637 : vector<1x128xf32>
    %c3_332 = arith.constant 3 : index
    %c6_333 = arith.constant 6 : index
    %639 = memref.load %arg4[%c3_332, %c6_333] : memref<10x10xf32, #tpu.memory_space<smem>>
    %640 = vector.broadcast %639 : f32 to vector<1x128xf32>
    %641 = arith.mulf %640, %327 : vector<1x128xf32>
    %642 = arith.addf %638, %641 : vector<1x128xf32>
    %c3_334 = arith.constant 3 : index
    %c7_335 = arith.constant 7 : index
    %643 = memref.load %arg4[%c3_334, %c7_335] : memref<10x10xf32, #tpu.memory_space<smem>>
    %644 = vector.broadcast %643 : f32 to vector<1x128xf32>
    %645 = arith.mulf %644, %371 : vector<1x128xf32>
    %646 = arith.addf %642, %645 : vector<1x128xf32>
    %c3_336 = arith.constant 3 : index
    %c8_337 = arith.constant 8 : index
    %647 = memref.load %arg4[%c3_336, %c8_337] : memref<10x10xf32, #tpu.memory_space<smem>>
    %648 = vector.broadcast %647 : f32 to vector<1x128xf32>
    %649 = arith.mulf %648, %415 : vector<1x128xf32>
    %650 = arith.addf %646, %649 : vector<1x128xf32>
    %c3_338 = arith.constant 3 : index
    %c9_339 = arith.constant 9 : index
    %651 = memref.load %arg4[%c3_338, %c9_339] : memref<10x10xf32, #tpu.memory_space<smem>>
    %652 = vector.broadcast %651 : f32 to vector<1x128xf32>
    %653 = arith.mulf %652, %459 : vector<1x128xf32>
    %654 = arith.addf %650, %653 : vector<1x128xf32>
    %c3_340 = arith.constant 3 : index
    %655 = memref.load %arg5[%c3_340] : memref<10xf32, #tpu.memory_space<smem>>
    %656 = vector.broadcast %655 : f32 to vector<1x128xf32>
    %657 = arith.addf %654, %656 : vector<1x128xf32>
    %cst_341 = arith.constant 5.000000e-01 : f32
    %658 = vector.broadcast %cst_341 : f32 to vector<1x128xf32>
    %659 = arith.mulf %658, %657 : vector<1x128xf32>
    %660 = math.tanh %659 : vector<1x128xf32>
    %cst_342 = arith.constant 1.000000e+00 : f32
    %661 = vector.broadcast %cst_342 : f32 to vector<1x128xf32>
    %662 = arith.addf %660, %661 : vector<1x128xf32>
    %cst_343 = arith.constant 5.000000e-01 : f32
    %663 = vector.broadcast %cst_343 : f32 to vector<1x128xf32>
    %664 = arith.mulf %663, %662 : vector<1x128xf32>
    %c3_344 = arith.constant 3 : index
    %c0_345 = arith.constant 0 : index
    %c0_346 = arith.constant 0 : index
    %665 = vector.load %arg6[%c3_344, %c0_345, %c0_346] : memref<10x1x128xf32, #tpu.memory_space<vmem>>, vector<1x1x128xf32>
    %666 = vector.shape_cast %665 : vector<1x1x128xf32> to vector<1x128xf32>
    %667 = vector.shape_cast %664 : vector<1x128xf32> to vector<1x1x128xf32>
    tpu.vector_store %arg6[%c3_344, %c0_345, %c0_346], %667 {strides = array<i32>} : memref<10x1x128xf32, #tpu.memory_space<vmem>>, vector<1x1x128xf32>,
    %c4_347 = arith.constant 4 : index
    %c0_348 = arith.constant 0 : index
    %668 = memref.load %arg4[%c4_347, %c0_348] : memref<10x10xf32, #tpu.memory_space<smem>>
    %669 = vector.broadcast %668 : f32 to vector<1x128xf32>
    %670 = arith.mulf %669, %63 : vector<1x128xf32>
    %c4_349 = arith.constant 4 : index
    %c1_350 = arith.constant 1 : index
    %671 = memref.load %arg4[%c4_349, %c1_350] : memref<10x10xf32, #tpu.memory_space<smem>>
    %672 = vector.broadcast %671 : f32 to vector<1x128xf32>
    %673 = arith.mulf %672, %107 : vector<1x128xf32>
    %674 = arith.addf %670, %673 : vector<1x128xf32>
    %c4_351 = arith.constant 4 : index
    %c2_352 = arith.constant 2 : index
    %675 = memref.load %arg4[%c4_351, %c2_352] : memref<10x10xf32, #tpu.memory_space<smem>>
    %676 = vector.broadcast %675 : f32 to vector<1x128xf32>
    %677 = arith.mulf %676, %151 : vector<1x128xf32>
    %678 = arith.addf %674, %677 : vector<1x128xf32>
    %c4_353 = arith.constant 4 : index
    %c3_354 = arith.constant 3 : index
    %679 = memref.load %arg4[%c4_353, %c3_354] : memref<10x10xf32, #tpu.memory_space<smem>>
    %680 = vector.broadcast %679 : f32 to vector<1x128xf32>
    %681 = arith.mulf %680, %195 : vector<1x128xf32>
    %682 = arith.addf %678, %681 : vector<1x128xf32>
    %c4_355 = arith.constant 4 : index
    %c4_356 = arith.constant 4 : index
    %683 = memref.load %arg4[%c4_355, %c4_356] : memref<10x10xf32, #tpu.memory_space<smem>>
    %684 = vector.broadcast %683 : f32 to vector<1x128xf32>
    %685 = arith.mulf %684, %239 : vector<1x128xf32>
    %686 = arith.addf %682, %685 : vector<1x128xf32>
    %c4_357 = arith.constant 4 : index
    %c5_358 = arith.constant 5 : index
    %687 = memref.load %arg4[%c4_357, %c5_358] : memref<10x10xf32, #tpu.memory_space<smem>>
    %688 = vector.broadcast %687 : f32 to vector<1x128xf32>
    %689 = arith.mulf %688, %283 : vector<1x128xf32>
    %690 = arith.addf %686, %689 : vector<1x128xf32>
    %c4_359 = arith.constant 4 : index
    %c6_360 = arith.constant 6 : index
    %691 = memref.load %arg4[%c4_359, %c6_360] : memref<10x10xf32, #tpu.memory_space<smem>>
    %692 = vector.broadcast %691 : f32 to vector<1x128xf32>
    %693 = arith.mulf %692, %327 : vector<1x128xf32>
    %694 = arith.addf %690, %693 : vector<1x128xf32>
    %c4_361 = arith.constant 4 : index
    %c7_362 = arith.constant 7 : index
    %695 = memref.load %arg4[%c4_361, %c7_362] : memref<10x10xf32, #tpu.memory_space<smem>>
    %696 = vector.broadcast %695 : f32 to vector<1x128xf32>
    %697 = arith.mulf %696, %371 : vector<1x128xf32>
    %698 = arith.addf %694, %697 : vector<1x128xf32>
    %c4_363 = arith.constant 4 : index
    %c8_364 = arith.constant 8 : index
    %699 = memref.load %arg4[%c4_363, %c8_364] : memref<10x10xf32, #tpu.memory_space<smem>>
    %700 = vector.broadcast %699 : f32 to vector<1x128xf32>
    %701 = arith.mulf %700, %415 : vector<1x128xf32>
    %702 = arith.addf %698, %701 : vector<1x128xf32>
    %c4_365 = arith.constant 4 : index
    %c9_366 = arith.constant 9 : index
    %703 = memref.load %arg4[%c4_365, %c9_366] : memref<10x10xf32, #tpu.memory_space<smem>>
    %704 = vector.broadcast %703 : f32 to vector<1x128xf32>
    %705 = arith.mulf %704, %459 : vector<1x128xf32>
    %706 = arith.addf %702, %705 : vector<1x128xf32>
    %c4_367 = arith.constant 4 : index
    %707 = memref.load %arg5[%c4_367] : memref<10xf32, #tpu.memory_space<smem>>
    %708 = vector.broadcast %707 : f32 to vector<1x128xf32>
    %709 = arith.addf %706, %708 : vector<1x128xf32>
    %cst_368 = arith.constant 5.000000e-01 : f32
    %710 = vector.broadcast %cst_368 : f32 to vector<1x128xf32>
    %711 = arith.mulf %710, %709 : vector<1x128xf32>
    %712 = math.tanh %711 : vector<1x128xf32>
    %cst_369 = arith.constant 1.000000e+00 : f32
    %713 = vector.broadcast %cst_369 : f32 to vector<1x128xf32>
    %714 = arith.addf %712, %713 : vector<1x128xf32>
    %cst_370 = arith.constant 5.000000e-01 : f32
    %715 = vector.broadcast %cst_370 : f32 to vector<1x128xf32>
    %716 = arith.mulf %715, %714 : vector<1x128xf32>
    %c4_371 = arith.constant 4 : index
    %c0_372 = arith.constant 0 : index
    %c0_373 = arith.constant 0 : index
    %717 = vector.load %arg6[%c4_371, %c0_372, %c0_373] : memref<10x1x128xf32, #tpu.memory_space<vmem>>, vector<1x1x128xf32>
    %718 = vector.shape_cast %717 : vector<1x1x128xf32> to vector<1x128xf32>
    %719 = vector.shape_cast %716 : vector<1x128xf32> to vector<1x1x128xf32>
    tpu.vector_store %arg6[%c4_371, %c0_372, %c0_373], %719 {strides = array<i32>} : memref<10x1x128xf32, #tpu.memory_space<vmem>>, vector<1x1x128xf32>,
    %c5_374 = arith.constant 5 : index
    %c0_375 = arith.constant 0 : index
    %720 = memref.load %arg4[%c5_374, %c0_375] : memref<10x10xf32, #tpu.memory_space<smem>>
    %721 = vector.broadcast %720 : f32 to vector<1x128xf32>
    %722 = arith.mulf %721, %63 : vector<1x128xf32>
    %c5_376 = arith.constant 5 : index
    %c1_377 = arith.constant 1 : index
    %723 = memref.load %arg4[%c5_376, %c1_377] : memref<10x10xf32, #tpu.memory_space<smem>>
    %724 = vector.broadcast %723 : f32 to vector<1x128xf32>
    %725 = arith.mulf %724, %107 : vector<1x128xf32>
    %726 = arith.addf %722, %725 : vector<1x128xf32>
    %c5_378 = arith.constant 5 : index
    %c2_379 = arith.constant 2 : index
    %727 = memref.load %arg4[%c5_378, %c2_379] : memref<10x10xf32, #tpu.memory_space<smem>>
    %728 = vector.broadcast %727 : f32 to vector<1x128xf32>
    %729 = arith.mulf %728, %151 : vector<1x128xf32>
    %730 = arith.addf %726, %729 : vector<1x128xf32>
    %c5_380 = arith.constant 5 : index
    %c3_381 = arith.constant 3 : index
    %731 = memref.load %arg4[%c5_380, %c3_381] : memref<10x10xf32, #tpu.memory_space<smem>>
    %732 = vector.broadcast %731 : f32 to vector<1x128xf32>
    %733 = arith.mulf %732, %195 : vector<1x128xf32>
    %734 = arith.addf %730, %733 : vector<1x128xf32>
    %c5_382 = arith.constant 5 : index
    %c4_383 = arith.constant 4 : index
    %735 = memref.load %arg4[%c5_382, %c4_383] : memref<10x10xf32, #tpu.memory_space<smem>>
    %736 = vector.broadcast %735 : f32 to vector<1x128xf32>
    %737 = arith.mulf %736, %239 : vector<1x128xf32>
    %738 = arith.addf %734, %737 : vector<1x128xf32>
    %c5_384 = arith.constant 5 : index
    %c5_385 = arith.constant 5 : index
    %739 = memref.load %arg4[%c5_384, %c5_385] : memref<10x10xf32, #tpu.memory_space<smem>>
    %740 = vector.broadcast %739 : f32 to vector<1x128xf32>
    %741 = arith.mulf %740, %283 : vector<1x128xf32>
    %742 = arith.addf %738, %741 : vector<1x128xf32>
    %c5_386 = arith.constant 5 : index
    %c6_387 = arith.constant 6 : index
    %743 = memref.load %arg4[%c5_386, %c6_387] : memref<10x10xf32, #tpu.memory_space<smem>>
    %744 = vector.broadcast %743 : f32 to vector<1x128xf32>
    %745 = arith.mulf %744, %327 : vector<1x128xf32>
    %746 = arith.addf %742, %745 : vector<1x128xf32>
    %c5_388 = arith.constant 5 : index
    %c7_389 = arith.constant 7 : index
    %747 = memref.load %arg4[%c5_388, %c7_389] : memref<10x10xf32, #tpu.memory_space<smem>>
    %748 = vector.broadcast %747 : f32 to vector<1x128xf32>
    %749 = arith.mulf %748, %371 : vector<1x128xf32>
    %750 = arith.addf %746, %749 : vector<1x128xf32>
    %c5_390 = arith.constant 5 : index
    %c8_391 = arith.constant 8 : index
    %751 = memref.load %arg4[%c5_390, %c8_391] : memref<10x10xf32, #tpu.memory_space<smem>>
    %752 = vector.broadcast %751 : f32 to vector<1x128xf32>
    %753 = arith.mulf %752, %415 : vector<1x128xf32>
    %754 = arith.addf %750, %753 : vector<1x128xf32>
    %c5_392 = arith.constant 5 : index
    %c9_393 = arith.constant 9 : index
    %755 = memref.load %arg4[%c5_392, %c9_393] : memref<10x10xf32, #tpu.memory_space<smem>>
    %756 = vector.broadcast %755 : f32 to vector<1x128xf32>
    %757 = arith.mulf %756, %459 : vector<1x128xf32>
    %758 = arith.addf %754, %757 : vector<1x128xf32>
    %c5_394 = arith.constant 5 : index
    %759 = memref.load %arg5[%c5_394] : memref<10xf32, #tpu.memory_space<smem>>
    %760 = vector.broadcast %759 : f32 to vector<1x128xf32>
    %761 = arith.addf %758, %760 : vector<1x128xf32>
    %cst_395 = arith.constant 5.000000e-01 : f32
    %762 = vector.broadcast %cst_395 : f32 to vector<1x128xf32>
    %763 = arith.mulf %762, %761 : vector<1x128xf32>
    %764 = math.tanh %763 : vector<1x128xf32>
    %cst_396 = arith.constant 1.000000e+00 : f32
    %765 = vector.broadcast %cst_396 : f32 to vector<1x128xf32>
    %766 = arith.addf %764, %765 : vector<1x128xf32>
    %cst_397 = arith.constant 5.000000e-01 : f32
    %767 = vector.broadcast %cst_397 : f32 to vector<1x128xf32>
    %768 = arith.mulf %767, %766 : vector<1x128xf32>
    %c5_398 = arith.constant 5 : index
    %c0_399 = arith.constant 0 : index
    %c0_400 = arith.constant 0 : index
    %769 = vector.load %arg6[%c5_398, %c0_399, %c0_400] : memref<10x1x128xf32, #tpu.memory_space<vmem>>, vector<1x1x128xf32>
    %770 = vector.shape_cast %769 : vector<1x1x128xf32> to vector<1x128xf32>
    %771 = vector.shape_cast %768 : vector<1x128xf32> to vector<1x1x128xf32>
    tpu.vector_store %arg6[%c5_398, %c0_399, %c0_400], %771 {strides = array<i32>} : memref<10x1x128xf32, #tpu.memory_space<vmem>>, vector<1x1x128xf32>,
    %c6_401 = arith.constant 6 : index
    %c0_402 = arith.constant 0 : index
    %772 = memref.load %arg4[%c6_401, %c0_402] : memref<10x10xf32, #tpu.memory_space<smem>>
    %773 = vector.broadcast %772 : f32 to vector<1x128xf32>
    %774 = arith.mulf %773, %63 : vector<1x128xf32>
    %c6_403 = arith.constant 6 : index
    %c1_404 = arith.constant 1 : index
    %775 = memref.load %arg4[%c6_403, %c1_404] : memref<10x10xf32, #tpu.memory_space<smem>>
    %776 = vector.broadcast %775 : f32 to vector<1x128xf32>
    %777 = arith.mulf %776, %107 : vector<1x128xf32>
    %778 = arith.addf %774, %777 : vector<1x128xf32>
    %c6_405 = arith.constant 6 : index
    %c2_406 = arith.constant 2 : index
    %779 = memref.load %arg4[%c6_405, %c2_406] : memref<10x10xf32, #tpu.memory_space<smem>>
    %780 = vector.broadcast %779 : f32 to vector<1x128xf32>
    %781 = arith.mulf %780, %151 : vector<1x128xf32>
    %782 = arith.addf %778, %781 : vector<1x128xf32>
    %c6_407 = arith.constant 6 : index
    %c3_408 = arith.constant 3 : index
    %783 = memref.load %arg4[%c6_407, %c3_408] : memref<10x10xf32, #tpu.memory_space<smem>>
    %784 = vector.broadcast %783 : f32 to vector<1x128xf32>
    %785 = arith.mulf %784, %195 : vector<1x128xf32>
    %786 = arith.addf %782, %785 : vector<1x128xf32>
    %c6_409 = arith.constant 6 : index
    %c4_410 = arith.constant 4 : index
    %787 = memref.load %arg4[%c6_409, %c4_410] : memref<10x10xf32, #tpu.memory_space<smem>>
    %788 = vector.broadcast %787 : f32 to vector<1x128xf32>
    %789 = arith.mulf %788, %239 : vector<1x128xf32>
    %790 = arith.addf %786, %789 : vector<1x128xf32>
    %c6_411 = arith.constant 6 : index
    %c5_412 = arith.constant 5 : index
    %791 = memref.load %arg4[%c6_411, %c5_412] : memref<10x10xf32, #tpu.memory_space<smem>>
    %792 = vector.broadcast %791 : f32 to vector<1x128xf32>
    %793 = arith.mulf %792, %283 : vector<1x128xf32>
    %794 = arith.addf %790, %793 : vector<1x128xf32>
    %c6_413 = arith.constant 6 : index
    %c6_414 = arith.constant 6 : index
    %795 = memref.load %arg4[%c6_413, %c6_414] : memref<10x10xf32, #tpu.memory_space<smem>>
    %796 = vector.broadcast %795 : f32 to vector<1x128xf32>
    %797 = arith.mulf %796, %327 : vector<1x128xf32>
    %798 = arith.addf %794, %797 : vector<1x128xf32>
    %c6_415 = arith.constant 6 : index
    %c7_416 = arith.constant 7 : index
    %799 = memref.load %arg4[%c6_415, %c7_416] : memref<10x10xf32, #tpu.memory_space<smem>>
    %800 = vector.broadcast %799 : f32 to vector<1x128xf32>
    %801 = arith.mulf %800, %371 : vector<1x128xf32>
    %802 = arith.addf %798, %801 : vector<1x128xf32>
    %c6_417 = arith.constant 6 : index
    %c8_418 = arith.constant 8 : index
    %803 = memref.load %arg4[%c6_417, %c8_418] : memref<10x10xf32, #tpu.memory_space<smem>>
    %804 = vector.broadcast %803 : f32 to vector<1x128xf32>
    %805 = arith.mulf %804, %415 : vector<1x128xf32>
    %806 = arith.addf %802, %805 : vector<1x128xf32>
    %c6_419 = arith.constant 6 : index
    %c9_420 = arith.constant 9 : index
    %807 = memref.load %arg4[%c6_419, %c9_420] : memref<10x10xf32, #tpu.memory_space<smem>>
    %808 = vector.broadcast %807 : f32 to vector<1x128xf32>
    %809 = arith.mulf %808, %459 : vector<1x128xf32>
    %810 = arith.addf %806, %809 : vector<1x128xf32>
    %c6_421 = arith.constant 6 : index
    %811 = memref.load %arg5[%c6_421] : memref<10xf32, #tpu.memory_space<smem>>
    %812 = vector.broadcast %811 : f32 to vector<1x128xf32>
    %813 = arith.addf %810, %812 : vector<1x128xf32>
    %cst_422 = arith.constant 5.000000e-01 : f32
    %814 = vector.broadcast %cst_422 : f32 to vector<1x128xf32>
    %815 = arith.mulf %814, %813 : vector<1x128xf32>
    %816 = math.tanh %815 : vector<1x128xf32>
    %cst_423 = arith.constant 1.000000e+00 : f32
    %817 = vector.broadcast %cst_423 : f32 to vector<1x128xf32>
    %818 = arith.addf %816, %817 : vector<1x128xf32>
    %cst_424 = arith.constant 5.000000e-01 : f32
    %819 = vector.broadcast %cst_424 : f32 to vector<1x128xf32>
    %820 = arith.mulf %819, %818 : vector<1x128xf32>
    %c6_425 = arith.constant 6 : index
    %c0_426 = arith.constant 0 : index
    %c0_427 = arith.constant 0 : index
    %821 = vector.load %arg6[%c6_425, %c0_426, %c0_427] : memref<10x1x128xf32, #tpu.memory_space<vmem>>, vector<1x1x128xf32>
    %822 = vector.shape_cast %821 : vector<1x1x128xf32> to vector<1x128xf32>
    %823 = vector.shape_cast %820 : vector<1x128xf32> to vector<1x1x128xf32>
    tpu.vector_store %arg6[%c6_425, %c0_426, %c0_427], %823 {strides = array<i32>} : memref<10x1x128xf32, #tpu.memory_space<vmem>>, vector<1x1x128xf32>,
    %c7_428 = arith.constant 7 : index
    %c0_429 = arith.constant 0 : index
    %824 = memref.load %arg4[%c7_428, %c0_429] : memref<10x10xf32, #tpu.memory_space<smem>>
    %825 = vector.broadcast %824 : f32 to vector<1x128xf32>
    %826 = arith.mulf %825, %63 : vector<1x128xf32>
    %c7_430 = arith.constant 7 : index
    %c1_431 = arith.constant 1 : index
    %827 = memref.load %arg4[%c7_430, %c1_431] : memref<10x10xf32, #tpu.memory_space<smem>>
    %828 = vector.broadcast %827 : f32 to vector<1x128xf32>
    %829 = arith.mulf %828, %107 : vector<1x128xf32>
    %830 = arith.addf %826, %829 : vector<1x128xf32>
    %c7_432 = arith.constant 7 : index
    %c2_433 = arith.constant 2 : index
    %831 = memref.load %arg4[%c7_432, %c2_433] : memref<10x10xf32, #tpu.memory_space<smem>>
    %832 = vector.broadcast %831 : f32 to vector<1x128xf32>
    %833 = arith.mulf %832, %151 : vector<1x128xf32>
    %834 = arith.addf %830, %833 : vector<1x128xf32>
    %c7_434 = arith.constant 7 : index
    %c3_435 = arith.constant 3 : index
    %835 = memref.load %arg4[%c7_434, %c3_435] : memref<10x10xf32, #tpu.memory_space<smem>>
    %836 = vector.broadcast %835 : f32 to vector<1x128xf32>
    %837 = arith.mulf %836, %195 : vector<1x128xf32>
    %838 = arith.addf %834, %837 : vector<1x128xf32>
    %c7_436 = arith.constant 7 : index
    %c4_437 = arith.constant 4 : index
    %839 = memref.load %arg4[%c7_436, %c4_437] : memref<10x10xf32, #tpu.memory_space<smem>>
    %840 = vector.broadcast %839 : f32 to vector<1x128xf32>
    %841 = arith.mulf %840, %239 : vector<1x128xf32>
    %842 = arith.addf %838, %841 : vector<1x128xf32>
    %c7_438 = arith.constant 7 : index
    %c5_439 = arith.constant 5 : index
    %843 = memref.load %arg4[%c7_438, %c5_439] : memref<10x10xf32, #tpu.memory_space<smem>>
    %844 = vector.broadcast %843 : f32 to vector<1x128xf32>
    %845 = arith.mulf %844, %283 : vector<1x128xf32>
    %846 = arith.addf %842, %845 : vector<1x128xf32>
    %c7_440 = arith.constant 7 : index
    %c6_441 = arith.constant 6 : index
    %847 = memref.load %arg4[%c7_440, %c6_441] : memref<10x10xf32, #tpu.memory_space<smem>>
    %848 = vector.broadcast %847 : f32 to vector<1x128xf32>
    %849 = arith.mulf %848, %327 : vector<1x128xf32>
    %850 = arith.addf %846, %849 : vector<1x128xf32>
    %c7_442 = arith.constant 7 : index
    %c7_443 = arith.constant 7 : index
    %851 = memref.load %arg4[%c7_442, %c7_443] : memref<10x10xf32, #tpu.memory_space<smem>>
    %852 = vector.broadcast %851 : f32 to vector<1x128xf32>
    %853 = arith.mulf %852, %371 : vector<1x128xf32>
    %854 = arith.addf %850, %853 : vector<1x128xf32>
    %c7_444 = arith.constant 7 : index
    %c8_445 = arith.constant 8 : index
    %855 = memref.load %arg4[%c7_444, %c8_445] : memref<10x10xf32, #tpu.memory_space<smem>>
    %856 = vector.broadcast %855 : f32 to vector<1x128xf32>
    %857 = arith.mulf %856, %415 : vector<1x128xf32>
    %858 = arith.addf %854, %857 : vector<1x128xf32>
    %c7_446 = arith.constant 7 : index
    %c9_447 = arith.constant 9 : index
    %859 = memref.load %arg4[%c7_446, %c9_447] : memref<10x10xf32, #tpu.memory_space<smem>>
    %860 = vector.broadcast %859 : f32 to vector<1x128xf32>
    %861 = arith.mulf %860, %459 : vector<1x128xf32>
    %862 = arith.addf %858, %861 : vector<1x128xf32>
    %c7_448 = arith.constant 7 : index
    %863 = memref.load %arg5[%c7_448] : memref<10xf32, #tpu.memory_space<smem>>
    %864 = vector.broadcast %863 : f32 to vector<1x128xf32>
    %865 = arith.addf %862, %864 : vector<1x128xf32>
    %cst_449 = arith.constant 5.000000e-01 : f32
    %866 = vector.broadcast %cst_449 : f32 to vector<1x128xf32>
    %867 = arith.mulf %866, %865 : vector<1x128xf32>
    %868 = math.tanh %867 : vector<1x128xf32>
    %cst_450 = arith.constant 1.000000e+00 : f32
    %869 = vector.broadcast %cst_450 : f32 to vector<1x128xf32>
    %870 = arith.addf %868, %869 : vector<1x128xf32>
    %cst_451 = arith.constant 5.000000e-01 : f32
    %871 = vector.broadcast %cst_451 : f32 to vector<1x128xf32>
    %872 = arith.mulf %871, %870 : vector<1x128xf32>
    %c7_452 = arith.constant 7 : index
    %c0_453 = arith.constant 0 : index
    %c0_454 = arith.constant 0 : index
    %873 = vector.load %arg6[%c7_452, %c0_453, %c0_454] : memref<10x1x128xf32, #tpu.memory_space<vmem>>, vector<1x1x128xf32>
    %874 = vector.shape_cast %873 : vector<1x1x128xf32> to vector<1x128xf32>
    %875 = vector.shape_cast %872 : vector<1x128xf32> to vector<1x1x128xf32>
    tpu.vector_store %arg6[%c7_452, %c0_453, %c0_454], %875 {strides = array<i32>} : memref<10x1x128xf32, #tpu.memory_space<vmem>>, vector<1x1x128xf32>,
    %c8_455 = arith.constant 8 : index
    %c0_456 = arith.constant 0 : index
    %876 = memref.load %arg4[%c8_455, %c0_456] : memref<10x10xf32, #tpu.memory_space<smem>>
    %877 = vector.broadcast %876 : f32 to vector<1x128xf32>
    %878 = arith.mulf %877, %63 : vector<1x128xf32>
    %c8_457 = arith.constant 8 : index
    %c1_458 = arith.constant 1 : index
    %879 = memref.load %arg4[%c8_457, %c1_458] : memref<10x10xf32, #tpu.memory_space<smem>>
    %880 = vector.broadcast %879 : f32 to vector<1x128xf32>
    %881 = arith.mulf %880, %107 : vector<1x128xf32>
    %882 = arith.addf %878, %881 : vector<1x128xf32>
    %c8_459 = arith.constant 8 : index
    %c2_460 = arith.constant 2 : index
    %883 = memref.load %arg4[%c8_459, %c2_460] : memref<10x10xf32, #tpu.memory_space<smem>>
    %884 = vector.broadcast %883 : f32 to vector<1x128xf32>
    %885 = arith.mulf %884, %151 : vector<1x128xf32>
    %886 = arith.addf %882, %885 : vector<1x128xf32>
    %c8_461 = arith.constant 8 : index
    %c3_462 = arith.constant 3 : index
    %887 = memref.load %arg4[%c8_461, %c3_462] : memref<10x10xf32, #tpu.memory_space<smem>>
    %888 = vector.broadcast %887 : f32 to vector<1x128xf32>
    %889 = arith.mulf %888, %195 : vector<1x128xf32>
    %890 = arith.addf %886, %889 : vector<1x128xf32>
    %c8_463 = arith.constant 8 : index
    %c4_464 = arith.constant 4 : index
    %891 = memref.load %arg4[%c8_463, %c4_464] : memref<10x10xf32, #tpu.memory_space<smem>>
    %892 = vector.broadcast %891 : f32 to vector<1x128xf32>
    %893 = arith.mulf %892, %239 : vector<1x128xf32>
    %894 = arith.addf %890, %893 : vector<1x128xf32>
    %c8_465 = arith.constant 8 : index
    %c5_466 = arith.constant 5 : index
    %895 = memref.load %arg4[%c8_465, %c5_466] : memref<10x10xf32, #tpu.memory_space<smem>>
    %896 = vector.broadcast %895 : f32 to vector<1x128xf32>
    %897 = arith.mulf %896, %283 : vector<1x128xf32>
    %898 = arith.addf %894, %897 : vector<1x128xf32>
    %c8_467 = arith.constant 8 : index
    %c6_468 = arith.constant 6 : index
    %899 = memref.load %arg4[%c8_467, %c6_468] : memref<10x10xf32, #tpu.memory_space<smem>>
    %900 = vector.broadcast %899 : f32 to vector<1x128xf32>
    %901 = arith.mulf %900, %327 : vector<1x128xf32>
    %902 = arith.addf %898, %901 : vector<1x128xf32>
    %c8_469 = arith.constant 8 : index
    %c7_470 = arith.constant 7 : index
    %903 = memref.load %arg4[%c8_469, %c7_470] : memref<10x10xf32, #tpu.memory_space<smem>>
    %904 = vector.broadcast %903 : f32 to vector<1x128xf32>
    %905 = arith.mulf %904, %371 : vector<1x128xf32>
    %906 = arith.addf %902, %905 : vector<1x128xf32>
    %c8_471 = arith.constant 8 : index
    %c8_472 = arith.constant 8 : index
    %907 = memref.load %arg4[%c8_471, %c8_472] : memref<10x10xf32, #tpu.memory_space<smem>>
    %908 = vector.broadcast %907 : f32 to vector<1x128xf32>
    %909 = arith.mulf %908, %415 : vector<1x128xf32>
    %910 = arith.addf %906, %909 : vector<1x128xf32>
    %c8_473 = arith.constant 8 : index
    %c9_474 = arith.constant 9 : index
    %911 = memref.load %arg4[%c8_473, %c9_474] : memref<10x10xf32, #tpu.memory_space<smem>>
    %912 = vector.broadcast %911 : f32 to vector<1x128xf32>
    %913 = arith.mulf %912, %459 : vector<1x128xf32>
    %914 = arith.addf %910, %913 : vector<1x128xf32>
    %c8_475 = arith.constant 8 : index
    %915 = memref.load %arg5[%c8_475] : memref<10xf32, #tpu.memory_space<smem>>
    %916 = vector.broadcast %915 : f32 to vector<1x128xf32>
    %917 = arith.addf %914, %916 : vector<1x128xf32>
    %cst_476 = arith.constant 5.000000e-01 : f32
    %918 = vector.broadcast %cst_476 : f32 to vector<1x128xf32>
    %919 = arith.mulf %918, %917 : vector<1x128xf32>
    %920 = math.tanh %919 : vector<1x128xf32>
    %cst_477 = arith.constant 1.000000e+00 : f32
    %921 = vector.broadcast %cst_477 : f32 to vector<1x128xf32>
    %922 = arith.addf %920, %921 : vector<1x128xf32>
    %cst_478 = arith.constant 5.000000e-01 : f32
    %923 = vector.broadcast %cst_478 : f32 to vector<1x128xf32>
    %924 = arith.mulf %923, %922 : vector<1x128xf32>
    %c8_479 = arith.constant 8 : index
    %c0_480 = arith.constant 0 : index
    %c0_481 = arith.constant 0 : index
    %925 = vector.load %arg6[%c8_479, %c0_480, %c0_481] : memref<10x1x128xf32, #tpu.memory_space<vmem>>, vector<1x1x128xf32>
    %926 = vector.shape_cast %925 : vector<1x1x128xf32> to vector<1x128xf32>
    %927 = vector.shape_cast %924 : vector<1x128xf32> to vector<1x1x128xf32>
    tpu.vector_store %arg6[%c8_479, %c0_480, %c0_481], %927 {strides = array<i32>} : memref<10x1x128xf32, #tpu.memory_space<vmem>>, vector<1x1x128xf32>,
    %c9_482 = arith.constant 9 : index
    %c0_483 = arith.constant 0 : index
    %928 = memref.load %arg4[%c9_482, %c0_483] : memref<10x10xf32, #tpu.memory_space<smem>>
    %929 = vector.broadcast %928 : f32 to vector<1x128xf32>
    %930 = arith.mulf %929, %63 : vector<1x128xf32>
    %c9_484 = arith.constant 9 : index
    %c1_485 = arith.constant 1 : index
    %931 = memref.load %arg4[%c9_484, %c1_485] : memref<10x10xf32, #tpu.memory_space<smem>>
    %932 = vector.broadcast %931 : f32 to vector<1x128xf32>
    %933 = arith.mulf %932, %107 : vector<1x128xf32>
    %934 = arith.addf %930, %933 : vector<1x128xf32>
    %c9_486 = arith.constant 9 : index
    %c2_487 = arith.constant 2 : index
    %935 = memref.load %arg4[%c9_486, %c2_487] : memref<10x10xf32, #tpu.memory_space<smem>>
    %936 = vector.broadcast %935 : f32 to vector<1x128xf32>
    %937 = arith.mulf %936, %151 : vector<1x128xf32>
    %938 = arith.addf %934, %937 : vector<1x128xf32>
    %c9_488 = arith.constant 9 : index
    %c3_489 = arith.constant 3 : index
    %939 = memref.load %arg4[%c9_488, %c3_489] : memref<10x10xf32, #tpu.memory_space<smem>>
    %940 = vector.broadcast %939 : f32 to vector<1x128xf32>
    %941 = arith.mulf %940, %195 : vector<1x128xf32>
    %942 = arith.addf %938, %941 : vector<1x128xf32>
    %c9_490 = arith.constant 9 : index
    %c4_491 = arith.constant 4 : index
    %943 = memref.load %arg4[%c9_490, %c4_491] : memref<10x10xf32, #tpu.memory_space<smem>>
    %944 = vector.broadcast %943 : f32 to vector<1x128xf32>
    %945 = arith.mulf %944, %239 : vector<1x128xf32>
    %946 = arith.addf %942, %945 : vector<1x128xf32>
    %c9_492 = arith.constant 9 : index
    %c5_493 = arith.constant 5 : index
    %947 = memref.load %arg4[%c9_492, %c5_493] : memref<10x10xf32, #tpu.memory_space<smem>>
    %948 = vector.broadcast %947 : f32 to vector<1x128xf32>
    %949 = arith.mulf %948, %283 : vector<1x128xf32>
    %950 = arith.addf %946, %949 : vector<1x128xf32>
    %c9_494 = arith.constant 9 : index
    %c6_495 = arith.constant 6 : index
    %951 = memref.load %arg4[%c9_494, %c6_495] : memref<10x10xf32, #tpu.memory_space<smem>>
    %952 = vector.broadcast %951 : f32 to vector<1x128xf32>
    %953 = arith.mulf %952, %327 : vector<1x128xf32>
    %954 = arith.addf %950, %953 : vector<1x128xf32>
    %c9_496 = arith.constant 9 : index
    %c7_497 = arith.constant 7 : index
    %955 = memref.load %arg4[%c9_496, %c7_497] : memref<10x10xf32, #tpu.memory_space<smem>>
    %956 = vector.broadcast %955 : f32 to vector<1x128xf32>
    %957 = arith.mulf %956, %371 : vector<1x128xf32>
    %958 = arith.addf %954, %957 : vector<1x128xf32>
    %c9_498 = arith.constant 9 : index
    %c8_499 = arith.constant 8 : index
    %959 = memref.load %arg4[%c9_498, %c8_499] : memref<10x10xf32, #tpu.memory_space<smem>>
    %960 = vector.broadcast %959 : f32 to vector<1x128xf32>
    %961 = arith.mulf %960, %415 : vector<1x128xf32>
    %962 = arith.addf %958, %961 : vector<1x128xf32>
    %c9_500 = arith.constant 9 : index
    %c9_501 = arith.constant 9 : index
    %963 = memref.load %arg4[%c9_500, %c9_501] : memref<10x10xf32, #tpu.memory_space<smem>>
    %964 = vector.broadcast %963 : f32 to vector<1x128xf32>
    %965 = arith.mulf %964, %459 : vector<1x128xf32>
    %966 = arith.addf %962, %965 : vector<1x128xf32>
    %c9_502 = arith.constant 9 : index
    %967 = memref.load %arg5[%c9_502] : memref<10xf32, #tpu.memory_space<smem>>
    %968 = vector.broadcast %967 : f32 to vector<1x128xf32>
    %969 = arith.addf %966, %968 : vector<1x128xf32>
    %cst_503 = arith.constant 5.000000e-01 : f32
    %970 = vector.broadcast %cst_503 : f32 to vector<1x128xf32>
    %971 = arith.mulf %970, %969 : vector<1x128xf32>
    %972 = math.tanh %971 : vector<1x128xf32>
    %cst_504 = arith.constant 1.000000e+00 : f32
    %973 = vector.broadcast %cst_504 : f32 to vector<1x128xf32>
    %974 = arith.addf %972, %973 : vector<1x128xf32>
    %cst_505 = arith.constant 5.000000e-01 : f32
    %975 = vector.broadcast %cst_505 : f32 to vector<1x128xf32>
    %976 = arith.mulf %975, %974 : vector<1x128xf32>
    %c9_506 = arith.constant 9 : index
    %c0_507 = arith.constant 0 : index
    %c0_508 = arith.constant 0 : index
    %977 = vector.load %arg6[%c9_506, %c0_507, %c0_508] : memref<10x1x128xf32, #tpu.memory_space<vmem>>, vector<1x1x128xf32>
    %978 = vector.shape_cast %977 : vector<1x1x128xf32> to vector<1x128xf32>
    %979 = vector.shape_cast %976 : vector<1x128xf32> to vector<1x1x128xf32>
    tpu.vector_store %arg6[%c9_506, %c0_507, %c0_508], %979 {strides = array<i32>} : memref<10x1x128xf32, #tpu.memory_space<vmem>>, vector<1x1x128xf32>,
    return
  }
  func.func @transform_0(%arg0: i32) -> (i32, i32, i32) {
    %c0_i32 = arith.constant 0 : i32
    %c0_i32_0 = arith.constant 0 : i32
    %c0_i32_1 = arith.constant 0 : i32
    return %c0_i32, %arg0, %c0_i32_0 : i32, i32, i32
  }
  func.func @transform_1(%arg0: i32) -> (i32, i32) {
    %c0_i32 = arith.constant 0 : i32
    %c0_i32_0 = arith.constant 0 : i32
    %c0_i32_1 = arith.constant 0 : i32
    return %c0_i32, %c0_i32_0 : i32, i32
  }
  func.func @transform_2(%arg0: i32) -> i32 {
    %c0_i32 = arith.constant 0 : i32
    %c0_i32_0 = arith.constant 0 : i32
    return %c0_i32 : i32
  }
  func.func @transform_3(%arg0: i32) -> (i32, i32) {
    %c0_i32 = arith.constant 0 : i32
    %c0_i32_0 = arith.constant 0 : i32
    %c0_i32_1 = arith.constant 0 : i32
    return %c0_i32, %c0_i32_0 : i32, i32
  }
  func.func @transform_4(%arg0: i32) -> i32 {
    %c0_i32 = arith.constant 0 : i32
    %c0_i32_0 = arith.constant 0 : i32
    return %c0_i32 : i32
  }
  func.func @transform_5(%arg0: i32) -> (i32, i32, i32) {
    %c0_i32 = arith.constant 0 : i32
    %c0_i32_0 = arith.constant 0 : i32
    %c0_i32_1 = arith.constant 0 : i32
    return %c0_i32, %arg0, %c0_i32_0 : i32, i32, i32
  }
}

</mosaic_0001>

<llo_original>
// kernel: tpu_custom_call.1
$region0: #{tpu_custom_call.1}
  #allocation0 [shape = 'u32[]', space=smem, size = 0x4, offset = 0x4, fixed_abs, tag = 'smem constant byte address 0x4 - core index']
  #allocation1 [shape = 'u32[144,128]{1,0:T(1,128)}', space=vmem, size = 0x12000, scoped, tag = 'internal scratch']
  %s0 = inlined_call_operand.hbm [shape: f32[10,1,128], index: 0, kind: input, shape index: {}]
  %s1 = inlined_call_operand.hbm [shape: f32[10,10], index: 1, kind: input, shape index: {}]
  %s2 = inlined_call_operand.vmem [shape: f32[10], index: 2, kind: input, shape index: {}]
  %s3 = inlined_call_operand.hbm [shape: f32[10,10], index: 3, kind: input, shape index: {}]
  %s4 = inlined_call_operand.vmem [shape: f32[10], index: 4, kind: input, shape index: {}]
  %s5 = inlined_call_operand.hbm [shape: f32[10,1,128], index: 5, kind: output, shape index: {}]
  %s6 = sld [smem:[#allocation0]]
  $region50: #{tpu_custom_call.1} parent=0
    _
  %s8 = ssub.s32 1, %s6
  %s9 = scalar_select 0, %s8, %s6
  $region1: #{tpu_custom_call.1} parent=0
    #allocation2 [shape = 'u8[5120]{0}', space=vmem, size = 0x1400, scoped, tag = 'input window, operand 0, single buffered']
    #allocation3 [shape = 's32[1]{0}', space=sflag, size = 0x4, scoped, tag = 'scoped memory for tpu_custom_call.1']
    #allocation4 [shape = 's32[1]{0}', space=sflag, size = 0x4, scoped, tag = 'scoped memory for tpu_custom_call.1']
    #allocation5 [shape = 's32[1]{0}', space=sflag, size = 0x4, scoped, tag = 'scoped memory for tpu_custom_call.1']
    #allocation6 [shape = 's32[1]{0}', space=sflag, size = 0x4, scoped, tag = 'scoped memory for tpu_custom_call.1']
    #allocation7 [shape = 'u8[8192]{0}', space=smem, size = 0x2000, scoped, tag = 'input window, operand 1, single buffered']
    #allocation8 [shape = 'u8[512]{0}', space=smem, size = 0x200, scoped, tag = 'input window, operand 2, single buffered']
    #allocation9 [shape = 'u8[8192]{0}', space=smem, size = 0x2000, scoped, tag = 'input window, operand 3, single buffered']
    #allocation10 [shape = 's32[1]{0}', space=sflag, size = 0x4, scoped, tag = 'scoped memory for tpu_custom_call.1']
    #allocation11 [shape = 'u8[512]{0}', space=smem, size = 0x200, scoped, tag = 'input window, operand 4, single buffered']
    #allocation12 [shape = 's32[1]{0}', space=sflag, size = 0x4, scoped, tag = 'scoped memory for tpu_custom_call.1']
    #allocation13 [shape = 'u8[5120]{0}', space=vmem, size = 0x1400, scoped, tag = 'output window, operand 0, single buffered']
    %10 = vsyncpa [#allocation3], 0
    %11 = vsyncpa [#allocation5], 0
    %12 = vsyncpa [#allocation6], 0
    %13 = vsyncpa [#allocation10], 0
    %14 = vsyncpa [#allocation12], 0
    %15 = vsyncpa [#allocation4], 0
    // Predicated region
    $region2: #{tpu_custom_call.1} parent=1 // pred_check
      _
    $region3: #{tpu_custom_call.1} parent=1 // pred_check_branch
      %17 = sbr.rel (0) target = $region5
    $region4: #{tpu_custom_call.1} parent=1 // pred_region
      %s19 = ssub.s32 160, 160
      %20 = vsyncadd [#allocation3], %s19
      %s21 = sshll.u32 [#allocation2], 4
      %s22 = int_to_ptr.vmem [resolvable:$true] %s21
      %27 = dma.hbm_to_vmem [thread:$0]  %s0, 160, %s22, [#allocation3], 16, 16, 1
    $region5: #{tpu_custom_call.1} parent=1 // pred_fallthru
      _
    // Predicated region
    $region6: #{tpu_custom_call.1} parent=1 // pred_check
      _
    $region7: #{tpu_custom_call.1} parent=1 // pred_check_branch
      %29 = sbr.rel (0) target = $region9
    $region8: #{tpu_custom_call.1} parent=1 // pred_region
      %s31 = ssub.s32 256, 256
      %32 = vsyncadd [#allocation5], %s31
      %37 = dma.hbm_to_smem %s1, 256, [#allocation7], [#allocation5], 128, 128, 8
    $region9: #{tpu_custom_call.1} parent=1 // pred_fallthru
      _
    // Predicated region
    $region10: #{tpu_custom_call.1} parent=1 // pred_check
      _
    $region11: #{tpu_custom_call.1} parent=1 // pred_check_branch
      %39 = sbr.rel (0) target = $region13
    $region12: #{tpu_custom_call.1} parent=1 // pred_region
      %s41 = ssub.s32 16, 16
      %42 = vsyncadd [#allocation6], %s41
      %s44 = sshll.u32 %s2, 4
      %s45 = int_to_ptr.vmem [resolvable:$true] %s44
      %47 = dma.vmem_to_smem %s45, 16, [#allocation8], [#allocation6]
    $region13: #{tpu_custom_call.1} parent=1 // pred_fallthru
      _
    // Predicated region
    $region14: #{tpu_custom_call.1} parent=1 // pred_check
      _
    $region15: #{tpu_custom_call.1} parent=1 // pred_check_branch
      %49 = sbr.rel (0) target = $region17
    $region16: #{tpu_custom_call.1} parent=1 // pred_region
      %s51 = ssub.s32 256, 256
      %52 = vsyncadd [#allocation10], %s51
      %57 = dma.hbm_to_smem %s3, 256, [#allocation9], [#allocation10], 128, 128, 8
    $region17: #{tpu_custom_call.1} parent=1 // pred_fallthru
      _
    // Predicated region
    $region18: #{tpu_custom_call.1} parent=1 // pred_check
      _
    $region19: #{tpu_custom_call.1} parent=1 // pred_check_branch
      %59 = sbr.rel (0) target = $region21
    $region20: #{tpu_custom_call.1} parent=1 // pred_region
      %s61 = ssub.s32 16, 16
      %62 = vsyncadd [#allocation12], %s61
      %s64 = sshll.u32 %s4, 4
      %s65 = int_to_ptr.vmem [resolvable:$true] %s64
      %67 = dma.vmem_to_smem %s65, 16, [#allocation11], [#allocation12]
    $region21: #{tpu_custom_call.1} parent=1 // pred_fallthru
      _
    // Predicated region
    $region22: #{tpu_custom_call.1} parent=1 // pred_check
      _
    $region23: #{tpu_custom_call.1} parent=1 // pred_check_branch
      %69 = sbr.rel (0) target = $region25
    $region24: #{tpu_custom_call.1} parent=1 // pred_region
      %70 = dma.done [#allocation3], 160
    $region25: #{tpu_custom_call.1} parent=1 // pred_fallthru
      _
    // Predicated region
    $region26: #{tpu_custom_call.1} parent=1 // pred_check
      _
    $region27: #{tpu_custom_call.1} parent=1 // pred_check_branch
      %72 = sbr.rel (0) target = $region29
    $region28: #{tpu_custom_call.1} parent=1 // pred_region
      %73 = dma.done [#allocation5], 256
    $region29: #{tpu_custom_call.1} parent=1 // pred_fallthru
      _
    // Predicated region
    $region30: #{tpu_custom_call.1} parent=1 // pred_check
      _
    $region31: #{tpu_custom_call.1} parent=1 // pred_check_branch
      %75 = sbr.rel (0) target = $region33
    $region32: #{tpu_custom_call.1} parent=1 // pred_region
      %76 = dma.done [#allocation6], 16
    $region33: #{tpu_custom_call.1} parent=1 // pred_fallthru
      _
    // Predicated region
    $region34: #{tpu_custom_call.1} parent=1 // pred_check
      _
    $region35: #{tpu_custom_call.1} parent=1 // pred_check_branch
      %78 = sbr.rel (0) target = $region37
    $region36: #{tpu_custom_call.1} parent=1 // pred_region
      %79 = dma.done [#allocation10], 256
    $region37: #{tpu_custom_call.1} parent=1 // pred_fallthru
      _
    // Predicated region
    $region38: #{tpu_custom_call.1} parent=1 // pred_check
      _
    $region39: #{tpu_custom_call.1} parent=1 // pred_check_branch
      %81 = sbr.rel (0) target = $region41
    $region40: #{tpu_custom_call.1} parent=1 // pred_region
      %82 = dma.done [#allocation12], 16
    $region41: #{tpu_custom_call.1} parent=1 // pred_fallthru
      _
    %83 = sfence
    %v84 = vld [vmem:[#allocation2] sm:$0x1]
    %s85 = scalar_lea.vmem [#allocation2], 1
    %v86 = vld [vmem:[%s85] sm:$0x1]
    %s87 = scalar_lea.vmem [#allocation2], 2
    %v88 = vld [vmem:[%s87] sm:$0x1]
    %s89 = scalar_lea.vmem [#allocation2], 3
    %v90 = vld [vmem:[%s89] sm:$0x1]
    %s91 = scalar_lea.vmem [#allocation2], 4
    %v92 = vld [vmem:[%s91] sm:$0x1]
    %s93 = scalar_lea.vmem [#allocation2], 5
    %v94 = vld [vmem:[%s93] sm:$0x1]
    %s95 = scalar_lea.vmem [#allocation2], 6
    %v96 = vld [vmem:[%s95] sm:$0x1]
    %s97 = scalar_lea.vmem [#allocation2], 7
    %v98 = vld [vmem:[%s97] sm:$0x1]
    %s99 = scalar_lea.vmem [#allocation2], 8
    %v100 = vld [vmem:[%s99] sm:$0x1]
    %s101 = scalar_lea.vmem [#allocation2], 9
    %v102 = vld [vmem:[%s101] sm:$0x1]
    %s103 = sld [smem:[#allocation7]]
    %v104 = vstv %s103
    %v105 = vmul.f32 %v104, %v84
    %s106 = sld [smem:[#allocation7 + $0x1]]
    %v107 = vstv %s106
    %v108 = vmul.f32 %v107, %v86
    %v109 = vadd.f32 %v105, %v108
    %s110 = sld [smem:[#allocation7 + $0x2]]
    %v111 = vstv %s110
    %v112 = vmul.f32 %v111, %v88
    %v113 = vadd.f32 %v109, %v112
    %s114 = sld [smem:[#allocation7 + $0x3]]
    %v115 = vstv %s114
    %v116 = vmul.f32 %v115, %v90
    %v117 = vadd.f32 %v113, %v116
    %s118 = sld [smem:[#allocation7 + $0x4]]
    %v119 = vstv %s118
    %v120 = vmul.f32 %v119, %v92
    %v121 = vadd.f32 %v117, %v120
    %s122 = sld [smem:[#allocation7 + $0x5]]
    %v123 = vstv %s122
    %v124 = vmul.f32 %v123, %v94
    %v125 = vadd.f32 %v121, %v124
    %s126 = sld [smem:[#allocation7 + $0x6]]
    %v127 = vstv %s126
    %v128 = vmul.f32 %v127, %v96
    %v129 = vadd.f32 %v125, %v128
    %s130 = sld [smem:[#allocation7 + $0x7]]
    %v131 = vstv %s130
    %v132 = vmul.f32 %v131, %v98
    %v133 = vadd.f32 %v129, %v132
    %s134 = sld [smem:[#allocation7 + $0x8]]
    %v135 = vstv %s134
    %v136 = vmul.f32 %v135, %v100
    %v137 = vadd.f32 %v133, %v136
    %s138 = sld [smem:[#allocation7 + $0x9]]
    %v139 = vstv %s138
    %v140 = vmul.f32 %v139, %v102
    %v141 = vadd.f32 %v137, %v140
    %s142 = sld [smem:[#allocation8]]
    %v143 = vstv %s142
    %v144 = vadd.f32 %v141, %v143
    %v145 = vmax.f32 %v144, 0.0
    %s146 = sld [smem:[#allocation7 + $0x80]]
    %v147 = vstv %s146
    %v148 = vmul.f32 %v147, %v84
    %s149 = sld [smem:[#allocation7 + $0x81]]
    %v150 = vstv %s149
    %v151 = vmul.f32 %v150, %v86
    %v152 = vadd.f32 %v148, %v151
    %s153 = sld [smem:[#allocation7 + $0x82]]
    %v154 = vstv %s153
    %v155 = vmul.f32 %v154, %v88
    %v156 = vadd.f32 %v152, %v155
    %s157 = sld [smem:[#allocation7 + $0x83]]
    %v158 = vstv %s157
    %v159 = vmul.f32 %v158, %v90
    %v160 = vadd.f32 %v156, %v159
    %s161 = sld [smem:[#allocation7 + $0x84]]
    %v162 = vstv %s161
    %v163 = vmul.f32 %v162, %v92
    %v164 = vadd.f32 %v160, %v163
    %s165 = sld [smem:[#allocation7 + $0x85]]
    %v166 = vstv %s165
    %v167 = vmul.f32 %v166, %v94
    %v168 = vadd.f32 %v164, %v167
    %s169 = sld [smem:[#allocation7 + $0x86]]
    %v170 = vstv %s169
    %v171 = vmul.f32 %v170, %v96
    %v172 = vadd.f32 %v168, %v171
    %s173 = sld [smem:[#allocation7 + $0x87]]
    %v174 = vstv %s173
    %v175 = vmul.f32 %v174, %v98
    %v176 = vadd.f32 %v172, %v175
    %s177 = sld [smem:[#allocation7 + $0x88]]
    %v178 = vstv %s177
    %v179 = vmul.f32 %v178, %v100
    %v180 = vadd.f32 %v176, %v179
    %s181 = sld [smem:[#allocation7 + $0x89]]
    %v182 = vstv %s181
    %v183 = vmul.f32 %v182, %v102
    %v184 = vadd.f32 %v180, %v183
    %s185 = sld [smem:[#allocation8 + $0x1]]
    %v186 = vstv %s185
    %v187 = vadd.f32 %v184, %v186
    %v188 = vmax.f32 %v187, 0.0
    %s189 = sld [smem:[#allocation7 + $0x100]]
    %v190 = vstv %s189
    %v191 = vmul.f32 %v190, %v84
    %s192 = sld [smem:[#allocation7 + $0x101]]
    %v193 = vstv %s192
    %v194 = vmul.f32 %v193, %v86
    %v195 = vadd.f32 %v191, %v194
    %s196 = sld [smem:[#allocation7 + $0x102]]
    %v197 = vstv %s196
    %v198 = vmul.f32 %v197, %v88
    %v199 = vadd.f32 %v195, %v198
    %s200 = sld [smem:[#allocation7 + $0x103]]
    %v201 = vstv %s200
    %v202 = vmul.f32 %v201, %v90
    %v203 = vadd.f32 %v199, %v202
    %s204 = sld [smem:[#allocation7 + $0x104]]
    %v205 = vstv %s204
    %v206 = vmul.f32 %v205, %v92
    %v207 = vadd.f32 %v203, %v206
    %s208 = sld [smem:[#allocation7 + $0x105]]
    %v209 = vstv %s208
    %v210 = vmul.f32 %v209, %v94
    %v211 = vadd.f32 %v207, %v210
    %s212 = sld [smem:[#allocation7 + $0x106]]
    %v213 = vstv %s212
    %v214 = vmul.f32 %v213, %v96
    %v215 = vadd.f32 %v211, %v214
    %s216 = sld [smem:[#allocation7 + $0x107]]
    %v217 = vstv %s216
    %v218 = vmul.f32 %v217, %v98
    %v219 = vadd.f32 %v215, %v218
    %s220 = sld [smem:[#allocation7 + $0x108]]
    %v221 = vstv %s220
    %v222 = vmul.f32 %v221, %v100
    %v223 = vadd.f32 %v219, %v222
    %s224 = sld [smem:[#allocation7 + $0x109]]
    %v225 = vstv %s224
    %v226 = vmul.f32 %v225, %v102
    %v227 = vadd.f32 %v223, %v226
    %s228 = sld [smem:[#allocation8 + $0x2]]
    %v229 = vstv %s228
    %v230 = vadd.f32 %v227, %v229
    %v231 = vmax.f32 %v230, 0.0
    %s232 = sld [smem:[#allocation7 + $0x180]]
    %v233 = vstv %s232
    %v234 = vmul.f32 %v233, %v84
    %s235 = sld [smem:[#allocation7 + $0x181]]
    %v236 = vstv %s235
    %v237 = vmul.f32 %v236, %v86
    %v238 = vadd.f32 %v234, %v237
    %s239 = sld [smem:[#allocation7 + $0x182]]
    %v240 = vstv %s239
    %v241 = vmul.f32 %v240, %v88
    %v242 = vadd.f32 %v238, %v241
    %s243 = sld [smem:[#allocation7 + $0x183]]
    %v244 = vstv %s243
    %v245 = vmul.f32 %v244, %v90
    %v246 = vadd.f32 %v242, %v245
    %s247 = sld [smem:[#allocation7 + $0x184]]
    %v248 = vstv %s247
    %v249 = vmul.f32 %v248, %v92
    %v250 = vadd.f32 %v246, %v249
    %s251 = sld [smem:[#allocation7 + $0x185]]
    %v252 = vstv %s251
    %v253 = vmul.f32 %v252, %v94
    %v254 = vadd.f32 %v250, %v253
    %s255 = sld [smem:[#allocation7 + $0x186]]
    %v256 = vstv %s255
    %v257 = vmul.f32 %v256, %v96
    %v258 = vadd.f32 %v254, %v257
    %s259 = sld [smem:[#allocation7 + $0x187]]
    %v260 = vstv %s259
    %v261 = vmul.f32 %v260, %v98
    %v262 = vadd.f32 %v258, %v261
    %s263 = sld [smem:[#allocation7 + $0x188]]
    %v264 = vstv %s263
    %v265 = vmul.f32 %v264, %v100
    %v266 = vadd.f32 %v262, %v265
    %s267 = sld [smem:[#allocation7 + $0x189]]
    %v268 = vstv %s267
    %v269 = vmul.f32 %v268, %v102
    %v270 = vadd.f32 %v266, %v269
    %s271 = sld [smem:[#allocation8 + $0x3]]
    %v272 = vstv %s271
    %v273 = vadd.f32 %v270, %v272
    %v274 = vmax.f32 %v273, 0.0
    %s275 = sld [smem:[#allocation7 + $0x200]]
    %v276 = vstv %s275
    %v277 = vmul.f32 %v276, %v84
    %s278 = sld [smem:[#allocation7 + $0x201]]
    %v279 = vstv %s278
    %v280 = vmul.f32 %v279, %v86
    %v281 = vadd.f32 %v277, %v280
    %s282 = sld [smem:[#allocation7 + $0x202]]
    %v283 = vstv %s282
    %v284 = vmul.f32 %v283, %v88
    %v285 = vadd.f32 %v281, %v284
    %s286 = sld [smem:[#allocation7 + $0x203]]
    %v287 = vstv %s286
    %v288 = vmul.f32 %v287, %v90
    %v289 = vadd.f32 %v285, %v288
    %s290 = sld [smem:[#allocation7 + $0x204]]
    %v291 = vstv %s290
    %v292 = vmul.f32 %v291, %v92
    %v293 = vadd.f32 %v289, %v292
    %s294 = sld [smem:[#allocation7 + $0x205]]
    %v295 = vstv %s294
    %v296 = vmul.f32 %v295, %v94
    %v297 = vadd.f32 %v293, %v296
    %s298 = sld [smem:[#allocation7 + $0x206]]
    %v299 = vstv %s298
    %v300 = vmul.f32 %v299, %v96
    %v301 = vadd.f32 %v297, %v300
    %s302 = sld [smem:[#allocation7 + $0x207]]
    %v303 = vstv %s302
    %v304 = vmul.f32 %v303, %v98
    %v305 = vadd.f32 %v301, %v304
    %s306 = sld [smem:[#allocation7 + $0x208]]
    %v307 = vstv %s306
    %v308 = vmul.f32 %v307, %v100
    %v309 = vadd.f32 %v305, %v308
    %s310 = sld [smem:[#allocation7 + $0x209]]
    %v311 = vstv %s310
    %v312 = vmul.f32 %v311, %v102
    %v313 = vadd.f32 %v309, %v312
    %s314 = sld [smem:[#allocation8 + $0x4]]
    %v315 = vstv %s314
    %v316 = vadd.f32 %v313, %v315
    %v317 = vmax.f32 %v316, 0.0
    %s318 = sld [smem:[#allocation7 + $0x280]]
    %v319 = vstv %s318
    %v320 = vmul.f32 %v319, %v84
    %s321 = sld [smem:[#allocation7 + $0x281]]
    %v322 = vstv %s321
    %v323 = vmul.f32 %v322, %v86
    %v324 = vadd.f32 %v320, %v323
    %s325 = sld [smem:[#allocation7 + $0x282]]
    %v326 = vstv %s325
    %v327 = vmul.f32 %v326, %v88
    %v328 = vadd.f32 %v324, %v327
    %s329 = sld [smem:[#allocation7 + $0x283]]
    %v330 = vstv %s329
    %v331 = vmul.f32 %v330, %v90
    %v332 = vadd.f32 %v328, %v331
    %s333 = sld [smem:[#allocation7 + $0x284]]
    %v334 = vstv %s333
    %v335 = vmul.f32 %v334, %v92
    %v336 = vadd.f32 %v332, %v335
    %s337 = sld [smem:[#allocation7 + $0x285]]
    %v338 = vstv %s337
    %v339 = vmul.f32 %v338, %v94
    %v340 = vadd.f32 %v336, %v339
    %s341 = sld [smem:[#allocation7 + $0x286]]
    %v342 = vstv %s341
    %v343 = vmul.f32 %v342, %v96
    %v344 = vadd.f32 %v340, %v343
    %s345 = sld [smem:[#allocation7 + $0x287]]
    %v346 = vstv %s345
    %v347 = vmul.f32 %v346, %v98
    %v348 = vadd.f32 %v344, %v347
    %s349 = sld [smem:[#allocation7 + $0x288]]
    %v350 = vstv %s349
    %v351 = vmul.f32 %v350, %v100
    %v352 = vadd.f32 %v348, %v351
    %s353 = sld [smem:[#allocation7 + $0x289]]
    %v354 = vstv %s353
    %v355 = vmul.f32 %v354, %v102
    %v356 = vadd.f32 %v352, %v355
    %s357 = sld [smem:[#allocation8 + $0x5]]
    %v358 = vstv %s357
    %v359 = vadd.f32 %v356, %v358
    %v360 = vmax.f32 %v359, 0.0
    %s361 = sld [smem:[#allocation7 + $0x300]]
    %v362 = vstv %s361
    %v363 = vmul.f32 %v362, %v84
    %s364 = sld [smem:[#allocation7 + $0x301]]
    %v365 = vstv %s364
    %v366 = vmul.f32 %v365, %v86
    %v367 = vadd.f32 %v363, %v366
    %s368 = sld [smem:[#allocation7 + $0x302]]
    %v369 = vstv %s368
    %v370 = vmul.f32 %v369, %v88
    %v371 = vadd.f32 %v367, %v370
    %s372 = sld [smem:[#allocation7 + $0x303]]
    %v373 = vstv %s372
    %v374 = vmul.f32 %v373, %v90
    %v375 = vadd.f32 %v371, %v374
    %s376 = sld [smem:[#allocation7 + $0x304]]
    %v377 = vstv %s376
    %v378 = vmul.f32 %v377, %v92
    %v379 = vadd.f32 %v375, %v378
    %s380 = sld [smem:[#allocation7 + $0x305]]
    %v381 = vstv %s380
    %v382 = vmul.f32 %v381, %v94
    %v383 = vadd.f32 %v379, %v382
    %s384 = sld [smem:[#allocation7 + $0x306]]
    %v385 = vstv %s384
    %v386 = vmul.f32 %v385, %v96
    %v387 = vadd.f32 %v383, %v386
    %s388 = sld [smem:[#allocation7 + $0x307]]
    %v389 = vstv %s388
    %v390 = vmul.f32 %v389, %v98
    %v391 = vadd.f32 %v387, %v390
    %s392 = sld [smem:[#allocation7 + $0x308]]
    %v393 = vstv %s392
    %v394 = vmul.f32 %v393, %v100
    %v395 = vadd.f32 %v391, %v394
    %s396 = sld [smem:[#allocation7 + $0x309]]
    %v397 = vstv %s396
    %v398 = vmul.f32 %v397, %v102
    %v399 = vadd.f32 %v395, %v398
    %s400 = sld [smem:[#allocation8 + $0x6]]
    %v401 = vstv %s400
    %v402 = vadd.f32 %v399, %v401
    %v403 = vmax.f32 %v402, 0.0
    %s404 = sld [smem:[#allocation7 + $0x380]]
    %v405 = vstv %s404
    %v406 = vmul.f32 %v405, %v84
    %s407 = sld [smem:[#allocation7 + $0x381]]
    %v408 = vstv %s407
    %v409 = vmul.f32 %v408, %v86
    %v410 = vadd.f32 %v406, %v409
    %s411 = sld [smem:[#allocation7 + $0x382]]
    %v412 = vstv %s411
    %v413 = vmul.f32 %v412, %v88
    %v414 = vadd.f32 %v410, %v413
    %s415 = sld [smem:[#allocation7 + $0x383]]
    %v416 = vstv %s415
    %v417 = vmul.f32 %v416, %v90
    %v418 = vadd.f32 %v414, %v417
    %s419 = sld [smem:[#allocation7 + $0x384]]
    %v420 = vstv %s419
    %v421 = vmul.f32 %v420, %v92
    %v422 = vadd.f32 %v418, %v421
    %s423 = sld [smem:[#allocation7 + $0x385]]
    %v424 = vstv %s423
    %v425 = vmul.f32 %v424, %v94
    %v426 = vadd.f32 %v422, %v425
    %s427 = sld [smem:[#allocation7 + $0x386]]
    %v428 = vstv %s427
    %v429 = vmul.f32 %v428, %v96
    %v430 = vadd.f32 %v426, %v429
    %s431 = sld [smem:[#allocation7 + $0x387]]
    %v432 = vstv %s431
    %v433 = vmul.f32 %v432, %v98
    %v434 = vadd.f32 %v430, %v433
    %s435 = sld [smem:[#allocation7 + $0x388]]
    %v436 = vstv %s435
    %v437 = vmul.f32 %v436, %v100
    %v438 = vadd.f32 %v434, %v437
    %s439 = sld [smem:[#allocation7 + $0x389]]
    %v440 = vstv %s439
    %v441 = vmul.f32 %v440, %v102
    %v442 = vadd.f32 %v438, %v441
    %s443 = sld [smem:[#allocation8 + $0x7]]
    %v444 = vstv %s443
    %v445 = vadd.f32 %v442, %v444
    %v446 = vmax.f32 %v445, 0.0
    %s447 = sld [smem:[#allocation7 + $0x400]]
    %v448 = vstv %s447
    %v449 = vmul.f32 %v448, %v84
    %s450 = sld [smem:[#allocation7 + $0x401]]
    %v451 = vstv %s450
    %v452 = vmul.f32 %v451, %v86
    %v453 = vadd.f32 %v449, %v452
    %s454 = sld [smem:[#allocation7 + $0x402]]
    %v455 = vstv %s454
    %v456 = vmul.f32 %v455, %v88
    %v457 = vadd.f32 %v453, %v456
    %s458 = sld [smem:[#allocation7 + $0x403]]
    %v459 = vstv %s458
    %v460 = vmul.f32 %v459, %v90
    %v461 = vadd.f32 %v457, %v460
    %s462 = sld [smem:[#allocation7 + $0x404]]
    %v463 = vstv %s462
    %v464 = vmul.f32 %v463, %v92
    %v465 = vadd.f32 %v461, %v464
    %s466 = sld [smem:[#allocation7 + $0x405]]
    %v467 = vstv %s466
    %v468 = vmul.f32 %v467, %v94
    %v469 = vadd.f32 %v465, %v468
    %s470 = sld [smem:[#allocation7 + $0x406]]
    %v471 = vstv %s470
    %v472 = vmul.f32 %v471, %v96
    %v473 = vadd.f32 %v469, %v472
    %s474 = sld [smem:[#allocation7 + $0x407]]
    %v475 = vstv %s474
    %v476 = vmul.f32 %v475, %v98
    %v477 = vadd.f32 %v473, %v476
    %s478 = sld [smem:[#allocation7 + $0x408]]
    %v479 = vstv %s478
    %v480 = vmul.f32 %v479, %v100
    %v481 = vadd.f32 %v477, %v480
    %s482 = sld [smem:[#allocation7 + $0x409]]
    %v483 = vstv %s482
    %v484 = vmul.f32 %v483, %v102
    %v485 = vadd.f32 %v481, %v484
    %s486 = sld [smem:[#allocation8 + $0x8]]
    %v487 = vstv %s486
    %v488 = vadd.f32 %v485, %v487
    %v489 = vmax.f32 %v488, 0.0
    %s490 = sld [smem:[#allocation7 + $0x480]]
    %v491 = vstv %s490
    %v492 = vmul.f32 %v491, %v84
    %s493 = sld [smem:[#allocation7 + $0x481]]
    %v494 = vstv %s493
    %v495 = vmul.f32 %v494, %v86
    %v496 = vadd.f32 %v492, %v495
    %s497 = sld [smem:[#allocation7 + $0x482]]
    %v498 = vstv %s497
    %v499 = vmul.f32 %v498, %v88
    %v500 = vadd.f32 %v496, %v499
    %s501 = sld [smem:[#allocation7 + $0x483]]
    %v502 = vstv %s501
    %v503 = vmul.f32 %v502, %v90
    %v504 = vadd.f32 %v500, %v503
    %s505 = sld [smem:[#allocation7 + $0x484]]
    %v506 = vstv %s505
    %v507 = vmul.f32 %v506, %v92
    %v508 = vadd.f32 %v504, %v507
    %s509 = sld [smem:[#allocation7 + $0x485]]
    %v510 = vstv %s509
    %v511 = vmul.f32 %v510, %v94
    %v512 = vadd.f32 %v508, %v511
    %s513 = sld [smem:[#allocation7 + $0x486]]
    %v514 = vstv %s513
    %v515 = vmul.f32 %v514, %v96
    %v516 = vadd.f32 %v512, %v515
    %s517 = sld [smem:[#allocation7 + $0x487]]
    %v518 = vstv %s517
    %v519 = vmul.f32 %v518, %v98
    %v520 = vadd.f32 %v516, %v519
    %s521 = sld [smem:[#allocation7 + $0x488]]
    %v522 = vstv %s521
    %v523 = vmul.f32 %v522, %v100
    %v524 = vadd.f32 %v520, %v523
    %s525 = sld [smem:[#allocation7 + $0x489]]
    %v526 = vstv %s525
    %v527 = vmul.f32 %v526, %v102
    %v528 = vadd.f32 %v524, %v527
    %s529 = sld [smem:[#allocation8 + $0x9]]
    %v530 = vstv %s529
    %v531 = vadd.f32 %v528, %v530
    %v532 = vmax.f32 %v531, 0.0
    %s533 = sld [smem:[#allocation9]]
    %v534 = vstv %s533
    %v535 = vmul.f32 %v534, %v145
    %s536 = sld [smem:[#allocation9 + $0x1]]
    %v537 = vstv %s536
    %v538 = vmul.f32 %v537, %v188
    %v539 = vadd.f32 %v535, %v538
    %s540 = sld [smem:[#allocation9 + $0x2]]
    %v541 = vstv %s540
    %v542 = vmul.f32 %v541, %v231
    %v543 = vadd.f32 %v539, %v542
    %s544 = sld [smem:[#allocation9 + $0x3]]
    %v545 = vstv %s544
    %v546 = vmul.f32 %v545, %v274
    %v547 = vadd.f32 %v543, %v546
    %s548 = sld [smem:[#allocation9 + $0x4]]
    %v549 = vstv %s548
    %v550 = vmul.f32 %v549, %v317
    %v551 = vadd.f32 %v547, %v550
    %s552 = sld [smem:[#allocation9 + $0x5]]
    %v553 = vstv %s552
    %v554 = vmul.f32 %v553, %v360
    %v555 = vadd.f32 %v551, %v554
    %s556 = sld [smem:[#allocation9 + $0x6]]
    %v557 = vstv %s556
    %v558 = vmul.f32 %v557, %v403
    %v559 = vadd.f32 %v555, %v558
    %s560 = sld [smem:[#allocation9 + $0x7]]
    %v561 = vstv %s560
    %v562 = vmul.f32 %v561, %v446
    %v563 = vadd.f32 %v559, %v562
    %s564 = sld [smem:[#allocation9 + $0x8]]
    %v565 = vstv %s564
    %v566 = vmul.f32 %v565, %v489
    %v567 = vadd.f32 %v563, %v566
    %s568 = sld [smem:[#allocation9 + $0x9]]
    %v569 = vstv %s568
    %v570 = vmul.f32 %v569, %v532
    %v571 = vadd.f32 %v567, %v570
    %s572 = sld [smem:[#allocation11]]
    %v573 = vstv %s572
    %v574 = vadd.f32 %v571, %v573
    %v575 = vmul.f32 %v574, 0.5
    %v576 = vtanh.pop %v575
    %v577 = vadd.f32 %v576, 1.0
    %v578 = vmul.f32 %v577, 0.5
    %579 = vst [vmem:[#allocation13] sm:$0x1] %v578
    %s580 = sld [smem:[#allocation9 + $0x80]]
    %v581 = vstv %s580
    %v582 = vmul.f32 %v581, %v145
    %s583 = sld [smem:[#allocation9 + $0x81]]
    %v584 = vstv %s583
    %v585 = vmul.f32 %v584, %v188
    %v586 = vadd.f32 %v582, %v585
    %s587 = sld [smem:[#allocation9 + $0x82]]
    %v588 = vstv %s587
    %v589 = vmul.f32 %v588, %v231
    %v590 = vadd.f32 %v586, %v589
    %s591 = sld [smem:[#allocation9 + $0x83]]
    %v592 = vstv %s591
    %v593 = vmul.f32 %v592, %v274
    %v594 = vadd.f32 %v590, %v593
    %s595 = sld [smem:[#allocation9 + $0x84]]
    %v596 = vstv %s595
    %v597 = vmul.f32 %v596, %v317
    %v598 = vadd.f32 %v594, %v597
    %s599 = sld [smem:[#allocation9 + $0x85]]
    %v600 = vstv %s599
    %v601 = vmul.f32 %v600, %v360
    %v602 = vadd.f32 %v598, %v601
    %s603 = sld [smem:[#allocation9 + $0x86]]
    %v604 = vstv %s603
    %v605 = vmul.f32 %v604, %v403
    %v606 = vadd.f32 %v602, %v605
    %s607 = sld [smem:[#allocation9 + $0x87]]
    %v608 = vstv %s607
    %v609 = vmul.f32 %v608, %v446
    %v610 = vadd.f32 %v606, %v609
    %s611 = sld [smem:[#allocation9 + $0x88]]
    %v612 = vstv %s611
    %v613 = vmul.f32 %v612, %v489
    %v614 = vadd.f32 %v610, %v613
    %s615 = sld [smem:[#allocation9 + $0x89]]
    %v616 = vstv %s615
    %v617 = vmul.f32 %v616, %v532
    %v618 = vadd.f32 %v614, %v617
    %s619 = sld [smem:[#allocation11 + $0x1]]
    %v620 = vstv %s619
    %v621 = vadd.f32 %v618, %v620
    %v622 = vmul.f32 %v621, 0.5
    %v623 = vtanh.pop %v622
    %v624 = vadd.f32 %v623, 1.0
    %v625 = vmul.f32 %v624, 0.5
    %s626 = scalar_lea.vmem [#allocation13], 1
    %627 = vst [vmem:[%s626] sm:$0x1] %v625
    %s628 = sld [smem:[#allocation9 + $0x100]]
    %v629 = vstv %s628
    %v630 = vmul.f32 %v629, %v145
    %s631 = sld [smem:[#allocation9 + $0x101]]
    %v632 = vstv %s631
    %v633 = vmul.f32 %v632, %v188
    %v634 = vadd.f32 %v630, %v633
    %s635 = sld [smem:[#allocation9 + $0x102]]
    %v636 = vstv %s635
    %v637 = vmul.f32 %v636, %v231
    %v638 = vadd.f32 %v634, %v637
    %s639 = sld [smem:[#allocation9 + $0x103]]
    %v640 = vstv %s639
    %v641 = vmul.f32 %v640, %v274
    %v642 = vadd.f32 %v638, %v641
    %s643 = sld [smem:[#allocation9 + $0x104]]
    %v644 = vstv %s643
    %v645 = vmul.f32 %v644, %v317
    %v646 = vadd.f32 %v642, %v645
    %s647 = sld [smem:[#allocation9 + $0x105]]
    %v648 = vstv %s647
    %v649 = vmul.f32 %v648, %v360
    %v650 = vadd.f32 %v646, %v649
    %s651 = sld [smem:[#allocation9 + $0x106]]
    %v652 = vstv %s651
    %v653 = vmul.f32 %v652, %v403
    %v654 = vadd.f32 %v650, %v653
    %s655 = sld [smem:[#allocation9 + $0x107]]
    %v656 = vstv %s655
    %v657 = vmul.f32 %v656, %v446
    %v658 = vadd.f32 %v654, %v657
    %s659 = sld [smem:[#allocation9 + $0x108]]
    %v660 = vstv %s659
    %v661 = vmul.f32 %v660, %v489
    %v662 = vadd.f32 %v658, %v661
    %s663 = sld [smem:[#allocation9 + $0x109]]
    %v664 = vstv %s663
    %v665 = vmul.f32 %v664, %v532
    %v666 = vadd.f32 %v662, %v665
    %s667 = sld [smem:[#allocation11 + $0x2]]
    %v668 = vstv %s667
    %v669 = vadd.f32 %v666, %v668
    %v670 = vmul.f32 %v669, 0.5
    %v671 = vtanh.pop %v670
    %v672 = vadd.f32 %v671, 1.0
    %v673 = vmul.f32 %v672, 0.5
    %s674 = scalar_lea.vmem [#allocation13], 2
    %675 = vst [vmem:[%s674] sm:$0x1] %v673
    %s676 = sld [smem:[#allocation9 + $0x180]]
    %v677 = vstv %s676
    %v678 = vmul.f32 %v677, %v145
    %s679 = sld [smem:[#allocation9 + $0x181]]
    %v680 = vstv %s679
    %v681 = vmul.f32 %v680, %v188
    %v682 = vadd.f32 %v678, %v681
    %s683 = sld [smem:[#allocation9 + $0x182]]
    %v684 = vstv %s683
    %v685 = vmul.f32 %v684, %v231
    %v686 = vadd.f32 %v682, %v685
    %s687 = sld [smem:[#allocation9 + $0x183]]
    %v688 = vstv %s687
    %v689 = vmul.f32 %v688, %v274
    %v690 = vadd.f32 %v686, %v689
    %s691 = sld [smem:[#allocation9 + $0x184]]
    %v692 = vstv %s691
    %v693 = vmul.f32 %v692, %v317
    %v694 = vadd.f32 %v690, %v693
    %s695 = sld [smem:[#allocation9 + $0x185]]
    %v696 = vstv %s695
    %v697 = vmul.f32 %v696, %v360
    %v698 = vadd.f32 %v694, %v697
    %s699 = sld [smem:[#allocation9 + $0x186]]
    %v700 = vstv %s699
    %v701 = vmul.f32 %v700, %v403
    %v702 = vadd.f32 %v698, %v701
    %s703 = sld [smem:[#allocation9 + $0x187]]
    %v704 = vstv %s703
    %v705 = vmul.f32 %v704, %v446
    %v706 = vadd.f32 %v702, %v705
    %s707 = sld [smem:[#allocation9 + $0x188]]
    %v708 = vstv %s707
    %v709 = vmul.f32 %v708, %v489
    %v710 = vadd.f32 %v706, %v709
    %s711 = sld [smem:[#allocation9 + $0x189]]
    %v712 = vstv %s711
    %v713 = vmul.f32 %v712, %v532
    %v714 = vadd.f32 %v710, %v713
    %s715 = sld [smem:[#allocation11 + $0x3]]
    %v716 = vstv %s715
    %v717 = vadd.f32 %v714, %v716
    %v718 = vmul.f32 %v717, 0.5
    %v719 = vtanh.pop %v718
    %v720 = vadd.f32 %v719, 1.0
    %v721 = vmul.f32 %v720, 0.5
    %s722 = scalar_lea.vmem [#allocation13], 3
    %723 = vst [vmem:[%s722] sm:$0x1] %v721
    %s724 = sld [smem:[#allocation9 + $0x200]]
    %v725 = vstv %s724
    %v726 = vmul.f32 %v725, %v145
    %s727 = sld [smem:[#allocation9 + $0x201]]
    %v728 = vstv %s727
    %v729 = vmul.f32 %v728, %v188
    %v730 = vadd.f32 %v726, %v729
    %s731 = sld [smem:[#allocation9 + $0x202]]
    %v732 = vstv %s731
    %v733 = vmul.f32 %v732, %v231
    %v734 = vadd.f32 %v730, %v733
    %s735 = sld [smem:[#allocation9 + $0x203]]
    %v736 = vstv %s735
    %v737 = vmul.f32 %v736, %v274
    %v738 = vadd.f32 %v734, %v737
    %s739 = sld [smem:[#allocation9 + $0x204]]
    %v740 = vstv %s739
    %v741 = vmul.f32 %v740, %v317
    %v742 = vadd.f32 %v738, %v741
    %s743 = sld [smem:[#allocation9 + $0x205]]
    %v744 = vstv %s743
    %v745 = vmul.f32 %v744, %v360
    %v746 = vadd.f32 %v742, %v745
    %s747 = sld [smem:[#allocation9 + $0x206]]
    %v748 = vstv %s747
    %v749 = vmul.f32 %v748, %v403
    %v750 = vadd.f32 %v746, %v749
    %s751 = sld [smem:[#allocation9 + $0x207]]
    %v752 = vstv %s751
    %v753 = vmul.f32 %v752, %v446
    %v754 = vadd.f32 %v750, %v753
    %s755 = sld [smem:[#allocation9 + $0x208]]
    %v756 = vstv %s755
    %v757 = vmul.f32 %v756, %v489
    %v758 = vadd.f32 %v754, %v757
    %s759 = sld [smem:[#allocation9 + $0x209]]
    %v760 = vstv %s759
    %v761 = vmul.f32 %v760, %v532
    %v762 = vadd.f32 %v758, %v761
    %s763 = sld [smem:[#allocation11 + $0x4]]
    %v764 = vstv %s763
    %v765 = vadd.f32 %v762, %v764
    %v766 = vmul.f32 %v765, 0.5
    %v767 = vtanh.pop %v766
    %v768 = vadd.f32 %v767, 1.0
    %v769 = vmul.f32 %v768, 0.5
    %s770 = scalar_lea.vmem [#allocation13], 4
    %771 = vst [vmem:[%s770] sm:$0x1] %v769
    %s772 = sld [smem:[#allocation9 + $0x280]]
    %v773 = vstv %s772
    %v774 = vmul.f32 %v773, %v145
    %s775 = sld [smem:[#allocation9 + $0x281]]
    %v776 = vstv %s775
    %v777 = vmul.f32 %v776, %v188
    %v778 = vadd.f32 %v774, %v777
    %s779 = sld [smem:[#allocation9 + $0x282]]
    %v780 = vstv %s779
    %v781 = vmul.f32 %v780, %v231
    %v782 = vadd.f32 %v778, %v781
    %s783 = sld [smem:[#allocation9 + $0x283]]
    %v784 = vstv %s783
    %v785 = vmul.f32 %v784, %v274
    %v786 = vadd.f32 %v782, %v785
    %s787 = sld [smem:[#allocation9 + $0x284]]
    %v788 = vstv %s787
    %v789 = vmul.f32 %v788, %v317
    %v790 = vadd.f32 %v786, %v789
    %s791 = sld [smem:[#allocation9 + $0x285]]
    %v792 = vstv %s791
    %v793 = vmul.f32 %v792, %v360
    %v794 = vadd.f32 %v790, %v793
    %s795 = sld [smem:[#allocation9 + $0x286]]
    %v796 = vstv %s795
    %v797 = vmul.f32 %v796, %v403
    %v798 = vadd.f32 %v794, %v797
    %s799 = sld [smem:[#allocation9 + $0x287]]
    %v800 = vstv %s799
    %v801 = vmul.f32 %v800, %v446
    %v802 = vadd.f32 %v798, %v801
    %s803 = sld [smem:[#allocation9 + $0x288]]
    %v804 = vstv %s803
    %v805 = vmul.f32 %v804, %v489
    %v806 = vadd.f32 %v802, %v805
    %s807 = sld [smem:[#allocation9 + $0x289]]
    %v808 = vstv %s807
    %v809 = vmul.f32 %v808, %v532
    %v810 = vadd.f32 %v806, %v809
    %s811 = sld [smem:[#allocation11 + $0x5]]
    %v812 = vstv %s811
    %v813 = vadd.f32 %v810, %v812
    %v814 = vmul.f32 %v813, 0.5
    %v815 = vtanh.pop %v814
    %v816 = vadd.f32 %v815, 1.0
    %v817 = vmul.f32 %v816, 0.5
    %s818 = scalar_lea.vmem [#allocation13], 5
    %819 = vst [vmem:[%s818] sm:$0x1] %v817
    %s820 = sld [smem:[#allocation9 + $0x300]]
    %v821 = vstv %s820
    %v822 = vmul.f32 %v821, %v145
    %s823 = sld [smem:[#allocation9 + $0x301]]
    %v824 = vstv %s823
    %v825 = vmul.f32 %v824, %v188
    %v826 = vadd.f32 %v822, %v825
    %s827 = sld [smem:[#allocation9 + $0x302]]
    %v828 = vstv %s827
    %v829 = vmul.f32 %v828, %v231
    %v830 = vadd.f32 %v826, %v829
    %s831 = sld [smem:[#allocation9 + $0x303]]
    %v832 = vstv %s831
    %v833 = vmul.f32 %v832, %v274
    %v834 = vadd.f32 %v830, %v833
    %s835 = sld [smem:[#allocation9 + $0x304]]
    %v836 = vstv %s835
    %v837 = vmul.f32 %v836, %v317
    %v838 = vadd.f32 %v834, %v837
    %s839 = sld [smem:[#allocation9 + $0x305]]
    %v840 = vstv %s839
    %v841 = vmul.f32 %v840, %v360
    %v842 = vadd.f32 %v838, %v841
    %s843 = sld [smem:[#allocation9 + $0x306]]
    %v844 = vstv %s843
    %v845 = vmul.f32 %v844, %v403
    %v846 = vadd.f32 %v842, %v845
    %s847 = sld [smem:[#allocation9 + $0x307]]
    %v848 = vstv %s847
    %v849 = vmul.f32 %v848, %v446
    %v850 = vadd.f32 %v846, %v849
    %s851 = sld [smem:[#allocation9 + $0x308]]
    %v852 = vstv %s851
    %v853 = vmul.f32 %v852, %v489
    %v854 = vadd.f32 %v850, %v853
    %s855 = sld [smem:[#allocation9 + $0x309]]
    %v856 = vstv %s855
    %v857 = vmul.f32 %v856, %v532
    %v858 = vadd.f32 %v854, %v857
    %s859 = sld [smem:[#allocation11 + $0x6]]
    %v860 = vstv %s859
    %v861 = vadd.f32 %v858, %v860
    %v862 = vmul.f32 %v861, 0.5
    %v863 = vtanh.pop %v862
    %v864 = vadd.f32 %v863, 1.0
    %v865 = vmul.f32 %v864, 0.5
    %s866 = scalar_lea.vmem [#allocation13], 6
    %867 = vst [vmem:[%s866] sm:$0x1] %v865
    %s868 = sld [smem:[#allocation9 + $0x380]]
    %v869 = vstv %s868
    %v870 = vmul.f32 %v869, %v145
    %s871 = sld [smem:[#allocation9 + $0x381]]
    %v872 = vstv %s871
    %v873 = vmul.f32 %v872, %v188
    %v874 = vadd.f32 %v870, %v873
    %s875 = sld [smem:[#allocation9 + $0x382]]
    %v876 = vstv %s875
    %v877 = vmul.f32 %v876, %v231
    %v878 = vadd.f32 %v874, %v877
    %s879 = sld [smem:[#allocation9 + $0x383]]
    %v880 = vstv %s879
    %v881 = vmul.f32 %v880, %v274
    %v882 = vadd.f32 %v878, %v881
    %s883 = sld [smem:[#allocation9 + $0x384]]
    %v884 = vstv %s883
    %v885 = vmul.f32 %v884, %v317
    %v886 = vadd.f32 %v882, %v885
    %s887 = sld [smem:[#allocation9 + $0x385]]
    %v888 = vstv %s887
    %v889 = vmul.f32 %v888, %v360
    %v890 = vadd.f32 %v886, %v889
    %s891 = sld [smem:[#allocation9 + $0x386]]
    %v892 = vstv %s891
    %v893 = vmul.f32 %v892, %v403
    %v894 = vadd.f32 %v890, %v893
    %s895 = sld [smem:[#allocation9 + $0x387]]
    %v896 = vstv %s895
    %v897 = vmul.f32 %v896, %v446
    %v898 = vadd.f32 %v894, %v897
    %s899 = sld [smem:[#allocation9 + $0x388]]
    %v900 = vstv %s899
    %v901 = vmul.f32 %v900, %v489
    %v902 = vadd.f32 %v898, %v901
    %s903 = sld [smem:[#allocation9 + $0x389]]
    %v904 = vstv %s903
    %v905 = vmul.f32 %v904, %v532
    %v906 = vadd.f32 %v902, %v905
    %s907 = sld [smem:[#allocation11 + $0x7]]
    %v908 = vstv %s907
    %v909 = vadd.f32 %v906, %v908
    %v910 = vmul.f32 %v909, 0.5
    %v911 = vtanh.pop %v910
    %v912 = vadd.f32 %v911, 1.0
    %v913 = vmul.f32 %v912, 0.5
    %s914 = scalar_lea.vmem [#allocation13], 7
    %915 = vst [vmem:[%s914] sm:$0x1] %v913
    %s916 = sld [smem:[#allocation9 + $0x400]]
    %v917 = vstv %s916
    %v918 = vmul.f32 %v917, %v145
    %s919 = sld [smem:[#allocation9 + $0x401]]
    %v920 = vstv %s919
    %v921 = vmul.f32 %v920, %v188
    %v922 = vadd.f32 %v918, %v921
    %s923 = sld [smem:[#allocation9 + $0x402]]
    %v924 = vstv %s923
    %v925 = vmul.f32 %v924, %v231
    %v926 = vadd.f32 %v922, %v925
    %s927 = sld [smem:[#allocation9 + $0x403]]
    %v928 = vstv %s927
    %v929 = vmul.f32 %v928, %v274
    %v930 = vadd.f32 %v926, %v929
    %s931 = sld [smem:[#allocation9 + $0x404]]
    %v932 = vstv %s931
    %v933 = vmul.f32 %v932, %v317
    %v934 = vadd.f32 %v930, %v933
    %s935 = sld [smem:[#allocation9 + $0x405]]
    %v936 = vstv %s935
    %v937 = vmul.f32 %v936, %v360
    %v938 = vadd.f32 %v934, %v937
    %s939 = sld [smem:[#allocation9 + $0x406]]
    %v940 = vstv %s939
    %v941 = vmul.f32 %v940, %v403
    %v942 = vadd.f32 %v938, %v941
    %s943 = sld [smem:[#allocation9 + $0x407]]
    %v944 = vstv %s943
    %v945 = vmul.f32 %v944, %v446
    %v946 = vadd.f32 %v942, %v945
    %s947 = sld [smem:[#allocation9 + $0x408]]
    %v948 = vstv %s947
    %v949 = vmul.f32 %v948, %v489
    %v950 = vadd.f32 %v946, %v949
    %s951 = sld [smem:[#allocation9 + $0x409]]
    %v952 = vstv %s951
    %v953 = vmul.f32 %v952, %v532
    %v954 = vadd.f32 %v950, %v953
    %s955 = sld [smem:[#allocation11 + $0x8]]
    %v956 = vstv %s955
    %v957 = vadd.f32 %v954, %v956
    %v958 = vmul.f32 %v957, 0.5
    %v959 = vtanh.pop %v958
    %v960 = vadd.f32 %v959, 1.0
    %v961 = vmul.f32 %v960, 0.5
    %s962 = scalar_lea.vmem [#allocation13], 8
    %963 = vst [vmem:[%s962] sm:$0x1] %v961
    %s964 = sld [smem:[#allocation9 + $0x480]]
    %v965 = vstv %s964
    %v966 = vmul.f32 %v965, %v145
    %s967 = sld [smem:[#allocation9 + $0x481]]
    %v968 = vstv %s967
    %v969 = vmul.f32 %v968, %v188
    %v970 = vadd.f32 %v966, %v969
    %s971 = sld [smem:[#allocation9 + $0x482]]
    %v972 = vstv %s971
    %v973 = vmul.f32 %v972, %v231
    %v974 = vadd.f32 %v970, %v973
    %s975 = sld [smem:[#allocation9 + $0x483]]
    %v976 = vstv %s975
    %v977 = vmul.f32 %v976, %v274
    %v978 = vadd.f32 %v974, %v977
    %s979 = sld [smem:[#allocation9 + $0x484]]
    %v980 = vstv %s979
    %v981 = vmul.f32 %v980, %v317
    %v982 = vadd.f32 %v978, %v981
    %s983 = sld [smem:[#allocation9 + $0x485]]
    %v984 = vstv %s983
    %v985 = vmul.f32 %v984, %v360
    %v986 = vadd.f32 %v982, %v985
    %s987 = sld [smem:[#allocation9 + $0x486]]
    %v988 = vstv %s987
    %v989 = vmul.f32 %v988, %v403
    %v990 = vadd.f32 %v986, %v989
    %s991 = sld [smem:[#allocation9 + $0x487]]
    %v992 = vstv %s991
    %v993 = vmul.f32 %v992, %v446
    %v994 = vadd.f32 %v990, %v993
    %s995 = sld [smem:[#allocation9 + $0x488]]
    %v996 = vstv %s995
    %v997 = vmul.f32 %v996, %v489
    %v998 = vadd.f32 %v994, %v997
    %s999 = sld [smem:[#allocation9 + $0x489]]
    %v1000 = vstv %s999
    %v1001 = vmul.f32 %v1000, %v532
    %v1002 = vadd.f32 %v998, %v1001
    %s1003 = sld [smem:[#allocation11 + $0x9]]
    %v1004 = vstv %s1003
    %v1005 = vadd.f32 %v1002, %v1004
    %v1006 = vmul.f32 %v1005, 0.5
    %v1007 = vtanh.pop %v1006
    %v1008 = vadd.f32 %v1007, 1.0
    %v1009 = vmul.f32 %v1008, 0.5
    %s1010 = scalar_lea.vmem [#allocation13], 9
    %1011 = vst [vmem:[%s1010] sm:$0x1] %v1009
    // Predicated region
    $region42: #{tpu_custom_call.1} parent=1 // pred_check
      _
    $region43: #{tpu_custom_call.1} parent=1 // pred_check_branch
      %1013 = sbr.rel (0) target = $region45
    $region44: #{tpu_custom_call.1} parent=1 // pred_region
      %s1015 = ssub.s32 160, 160
      %1016 = vsyncadd [#allocation4], %s1015
      %s1017 = sshll.u32 [#allocation13], 4
      %s1018 = int_to_ptr.vmem [resolvable:$true] %s1017
      %1023 = dma.vmem_to_hbm [thread:$0]  %s1018, 160, %s5, [#allocation4], 16, 16, 1
    $region45: #{tpu_custom_call.1} parent=1 // pred_fallthru
      _
    // Predicated region
    $region46: #{tpu_custom_call.1} parent=1 // pred_check
      _
    $region47: #{tpu_custom_call.1} parent=1 // pred_check_branch
      %1025 = sbr.rel (0) target = $region49
    $region48: #{tpu_custom_call.1} parent=1 // pred_region
      %1026 = dma.done [#allocation4], 160
    $region49: #{tpu_custom_call.1} parent=1 // pred_fallthru
      _
    %1027 = vsyncpa [#allocation3], 1
    %1028 = vsyncpa [#allocation4], 1
    %1029 = vsyncpa [#allocation5], 1
    %1030 = vsyncpa [#allocation10], 1
    %1031 = vsyncpa [#allocation6], 1
    %1032 = vsyncpa [#allocation12], 1

</llo_original>
